<compile_context>
chip_gen: v7x
topology: tpu7x:2x2x1
jax: 0.10.0
libtpu: 0.0.40
codegen_flags: <defaults>
</compile_context>

<pallas_src>
import jax
import jax.numpy as jnp
from jax.experimental import pallas as pl
from jax.experimental.pallas import tpu as pltpu


# ----------------------------------------------------------------------------
# One-time weight preparation (hoisted out of the per-forward path)
# ----------------------------------------------------------------------------

def prepare_cross_attention_params(params):
    """params: dict wq/bq/wk/bk/wv/bv, with w of shape (D, D) in y = x @ w + b
    layout (i.e. transposed PyTorch weights). Returns prepared kernel params.

    scores_ij = scale * (x1_i Wq + bq) . (x2_j Wk + bk)
              = x1_i (scale Wq Wk^T) x2_j^T + (scale bq Wk^T) x2_j^T + const(j)
    The const(j) terms are softmax-invariant and dropped, so the K projection
    GEMM is eliminated from the kernel.
    """
    D = params["wq"].shape[0]
    scale = float(D) ** (-0.5)
    wqk = (scale * (params["wq"] @ params["wk"].T)).astype(jnp.bfloat16)   # (D, D)
    bqk = (scale * (params["bq"] @ params["wk"].T)).reshape(1, D).astype(jnp.float32)
    wv = params["wv"].astype(jnp.bfloat16)                                 # (D, D)
    bv = params["bv"].reshape(1, D).astype(jnp.float32)
    return {"wqk": wqk, "bqk": bqk, "wv": wv, "bv": bv}


# ----------------------------------------------------------------------------
# Fused cross-attention kernel (batch_block batch rows per grid step)
# ----------------------------------------------------------------------------

def _fused_cross_attn_kernel(x1_ref, x2_ref, wqk_ref, bqk_ref, wv_ref, bv_ref,
                             o_ref):
    # In-kernel bf16 cast of the f32 inputs (VALU; hides under the MXU).
    x1 = x1_ref[...].astype(jnp.bfloat16)     # (Bt, S, D)
    x2 = x2_ref[...].astype(jnp.bfloat16)     # (Bt, S, D)

    wqk = wqk_ref[...]                        # (D, D) bf16  = scale * Wq Wk^T
    bqk = bqk_ref[...]                        # (1, D) f32   = scale * bq Wk^T
    wv = wv_ref[...]                          # (D, D) bf16
    bv = bv_ref[...]                          # (1, D) f32

    # Folded query projection (K projection eliminated); f32 accumulation.
    q = jnp.einsum("bsd,de->bse", x1, wqk,
                   preferred_element_type=jnp.float32) + bqk

    # Value projection.
    v = jnp.einsum("bsd,de->bse", x2, wv,
                   preferred_element_type=jnp.float32) + bv

    # scores = q' @ x2^T, contracting D directly (no XLU transpose of keys).
    s = jnp.einsum("bqd,bkd->bqk", q.astype(jnp.bfloat16), x2,
                   preferred_element_type=jnp.float32)     # (Bt, S, S) f32

    # Numerically stable softmax; exp in bf16, row-sum in f32, denominator
    # applied after the PV matmul via an approximate EUP reciprocal.
    m = jnp.max(s, axis=-1, keepdims=True)
    p = jnp.exp((s - m).astype(jnp.bfloat16))               # (Bt, S, S) bf16
    l = jnp.sum(p, axis=-1, dtype=jnp.float32, keepdims=True)

    o = jnp.einsum("bqk,bkd->bqd", p, v.astype(jnp.bfloat16),
                   preferred_element_type=jnp.float32)      # (Bt, S, D) f32
    o_ref[...] = (o * pl.reciprocal(l, approx=True)).astype(o_ref.dtype)


def cross_attention(x1, x2, prepared, *, batch_block=1, out_dtype=jnp.float32):
    """x1, x2: (B, S, D) float32. prepared: output of
    prepare_cross_attention_params. batch_block: batch rows per grid step
    (1 -> grid=(B,), good for v7x's 2 TCs; B -> single step, good for v5e/v6e).
    """
    B, S, D = x1.shape
    assert B % batch_block == 0
    grid = (B // batch_block,)

    return pl.pallas_call(
        _fused_cross_attn_kernel,
        out_shape=jax.ShapeDtypeStruct((B, S, D), out_dtype),
        grid=grid,
        in_specs=[
            pl.BlockSpec((batch_block, S, D), lambda b: (b, 0, 0)),   # x1 (f32)
            pl.BlockSpec((batch_block, S, D), lambda b: (b, 0, 0)),   # x2 (f32)
            pl.BlockSpec((D, D), lambda b: (0, 0)),                   # wqk
            pl.BlockSpec((1, D), lambda b: (0, 0)),                   # bqk
            pl.BlockSpec((D, D), lambda b: (0, 0)),                   # wv
            pl.BlockSpec((1, D), lambda b: (0, 0)),                   # bv
        ],
        out_specs=pl.BlockSpec((batch_block, S, D), lambda b: (b, 0, 0)),
        compiler_params=pltpu.CompilerParams(
            dimension_semantics=("parallel",)),
    )(x1, x2, prepared["wqk"], prepared["bqk"], prepared["wv"], prepared["bv"])


# ----------------------------------------------------------------------------
# Pure-JAX f32 reference (PyTorch semantics) for validation
# ----------------------------------------------------------------------------

def cross_attention_ref(x1, x2, params):
    D = x1.shape[-1]
    scale = float(D) ** (-0.5)
    q = x1 @ params["wq"] + params["bq"]
    k = x2 @ params["wk"] + params["bk"]
    v = x2 @ params["wv"] + params["bv"]
    attn = jax.nn.softmax(jnp.einsum("bqd,bkd->bqk", q, k) * scale, axis=-1)
    return jnp.einsum("bqk,bkd->bqd", attn, v)


# ----------------------------------------------------------------------------
# Main
# ----------------------------------------------------------------------------

if __name__ == "__main__":
    B, S, D = 2, 200, 128   # CrossAttention usage: dim=128, S = h*w

    key = jax.random.PRNGKey(0)
    kx1, kx2, kq, kk, kv = jax.random.split(key, 5)

    def init_linear(k, din, dout):
        kw, kb = jax.random.split(k)
        w = jax.random.normal(kw, (din, dout), jnp.float32) / jnp.sqrt(float(din))
        b = 0.1 * jax.random.normal(kb, (dout,), jnp.float32)
        return w, b

    wq, bq = init_linear(kq, D, D)
    wk, bk = init_linear(kk, D, D)
    wv, bv = init_linear(kv, D, D)
    params = {"wq": wq, "bq": bq, "wk": wk, "bk": bk, "wv": wv, "bv": bv}

    x1 = jax.random.normal(kx1, (B, S, D), jnp.float32)
    x2 = jax.random.normal(kx2, (B, S, D), jnp.float32)

    # One-time weight preparation (not part of the per-forward path).
    prepared = prepare_cross_attention_params(params)

    fwd = jax.jit(cross_attention)
    out = jax.block_until_ready(fwd(x1, x2, prepared))

    ref = cross_attention_ref(x1, x2, params)

    assert out.shape == (B, S, D)
    assert bool(jnp.all(jnp.isfinite(out)))
    # bf16 MXU operands / bf16 softmax numerator vs. f32 reference: loose tol.
    assert bool(jnp.allclose(out, ref, rtol=1e-1, atol=5e-2))
    print("KERNEL_OK")
</pallas_src>

<mosaic_0001>
module attributes {stable_mosaic.version = 11 : i64} {
  func.func @_fused_cross_attn_kernel(%arg0: i32, %arg1: memref<1x200x128xf32, #tpu.memory_space<vmem>>, %arg2: memref<1x200x128xf32, #tpu.memory_space<vmem>>, %arg3: memref<128x128xbf16, #tpu.memory_space<vmem>>, %arg4: memref<1x128xf32, #tpu.memory_space<vmem>>, %arg5: memref<128x128xbf16, #tpu.memory_space<vmem>>, %arg6: memref<1x128xf32, #tpu.memory_space<vmem>>, %arg7: memref<1x200x128xf32, #tpu.memory_space<vmem>>) attributes {dimension_semantics = [#tpu.dimension_semantics<parallel>], iteration_bounds = array<i64: 2>, scalar_prefetch = 0 : i64, scratch_operands = 0 : i64, tpu.core_type = #tpu.core_type<tc>, window_params = [{transform_indices = @transform_0, window_bounds = array<i64: 1, 200, 128>}, {transform_indices = @transform_1, window_bounds = array<i64: 1, 200, 128>}, {pipeline_mode = #tpu.pipeline_mode<synchronous>, transform_indices = @transform_2, window_bounds = array<i64: 128, 128>}, {pipeline_mode = #tpu.pipeline_mode<synchronous>, transform_indices = @transform_3, window_bounds = array<i64: 1, 128>}, {pipeline_mode = #tpu.pipeline_mode<synchronous>, transform_indices = @transform_4, window_bounds = array<i64: 128, 128>}, {pipeline_mode = #tpu.pipeline_mode<synchronous>, transform_indices = @transform_5, window_bounds = array<i64: 1, 128>}, {transform_indices = @transform_6, window_bounds = array<i64: 1, 200, 128>}]} {
    %c0 = arith.constant 0 : index
    %c0_0 = arith.constant 0 : index
    %c0_1 = arith.constant 0 : index
    %0 = vector.load %arg1[%c0, %c0_0, %c0_1] : memref<1x200x128xf32, #tpu.memory_space<vmem>>, vector<1x200x128xf32>
    %1 = arith.truncf %0 : vector<1x200x128xf32> to vector<1x200x128xbf16>
    %c0_2 = arith.constant 0 : index
    %c0_3 = arith.constant 0 : index
    %c0_4 = arith.constant 0 : index
    %2 = vector.load %arg2[%c0_2, %c0_3, %c0_4] : memref<1x200x128xf32, #tpu.memory_space<vmem>>, vector<1x200x128xf32>
    %3 = arith.truncf %2 : vector<1x200x128xf32> to vector<1x200x128xbf16>
    %c0_5 = arith.constant 0 : index
    %c0_6 = arith.constant 0 : index
    %4 = vector.load %arg3[%c0_5, %c0_6] : memref<128x128xbf16, #tpu.memory_space<vmem>>, vector<128x128xbf16>
    %c0_7 = arith.constant 0 : index
    %c0_8 = arith.constant 0 : index
    %5 = vector.load %arg4[%c0_7, %c0_8] : memref<1x128xf32, #tpu.memory_space<vmem>>, vector<1x128xf32>
    %c0_9 = arith.constant 0 : index
    %c0_10 = arith.constant 0 : index
    %6 = vector.load %arg5[%c0_9, %c0_10] : memref<128x128xbf16, #tpu.memory_space<vmem>>, vector<128x128xbf16>
    %c0_11 = arith.constant 0 : index
    %c0_12 = arith.constant 0 : index
    %7 = vector.load %arg6[%c0_11, %c0_12] : memref<1x128xf32, #tpu.memory_space<vmem>>, vector<1x128xf32>
    "tpu.trace_start"() <{level = 10 : i32, message = "bsd,de->bse"}> : () -> ()
    %cst = arith.constant dense<0.000000e+00> : vector<1x200x128xf32>
    %8 = tpu.matmul %1, %4, %cst {dimension_numbers = #tpu.dot_dimension_numbers<[2], [0], [0, 1], [1], [0, 0, 0, 1, 1, 1], [], []>} : vector<1x200x128xbf16>, vector<128x128xbf16>, vector<1x200x128xf32> -> vector<1x200x128xf32>
    "tpu.trace_stop"() : () -> ()
    %9 = vector.shape_cast %5 : vector<1x128xf32> to vector<1x1x128xf32>
    %10 = vector.broadcast %9 : vector<1x1x128xf32> to vector<1x200x128xf32>
    %11 = arith.addf %8, %10 : vector<1x200x128xf32>
    "tpu.trace_start"() <{level = 10 : i32, message = "bsd,de->bse"}> : () -> ()
    %cst_13 = arith.constant dense<0.000000e+00> : vector<1x200x128xf32>
    %12 = tpu.matmul %3, %6, %cst_13 {dimension_numbers = #tpu.dot_dimension_numbers<[2], [0], [0, 1], [1], [0, 0, 0, 1, 1, 1], [], []>} : vector<1x200x128xbf16>, vector<128x128xbf16>, vector<1x200x128xf32> -> vector<1x200x128xf32>
    "tpu.trace_stop"() : () -> ()
    %13 = vector.shape_cast %7 : vector<1x128xf32> to vector<1x1x128xf32>
    %14 = vector.broadcast %13 : vector<1x1x128xf32> to vector<1x200x128xf32>
    %15 = arith.addf %12, %14 : vector<1x200x128xf32>
    %16 = arith.truncf %11 : vector<1x200x128xf32> to vector<1x200x128xbf16>
    "tpu.trace_start"() <{level = 10 : i32, message = "bqd,bkd->bqk"}> : () -> ()
    %cst_14 = arith.constant dense<0.000000e+00> : vector<1x200x200xf32>
    %17 = tpu.matmul %16, %3, %cst_14 {dimension_numbers = #tpu.dot_dimension_numbers<[2], [2], [1], [1], [0, 0, 0, 1, 1, 1], [0], [0]>} : vector<1x200x128xbf16>, vector<1x200x128xbf16>, vector<1x200x200xf32> -> vector<1x200x200xf32>
    "tpu.trace_stop"() : () -> ()
    %cst_15 = arith.constant dense<0xFF800000> : vector<1x200xf32>
    %18 = vector.multi_reduction <maximumf>, %17, %cst_15 [2] : vector<1x200x200xf32> to vector<1x200xf32>
    %19 = vector.shape_cast %18 : vector<1x200xf32> to vector<1x200x1xf32>
    %20 = vector.broadcast %19 : vector<1x200x1xf32> to vector<1x200x200xf32>
    %21 = arith.subf %17, %20 : vector<1x200x200xf32>
    %22 = arith.truncf %21 : vector<1x200x200xf32> to vector<1x200x200xbf16>
    %23 = math.exp %22 : vector<1x200x200xbf16>
    %24 = arith.extf %23 : vector<1x200x200xbf16> to vector<1x200x200xf32>
    %cst_16 = arith.constant dense<0.000000e+00> : vector<1x200xf32>
    %25 = vector.multi_reduction <add>, %24, %cst_16 [2] : vector<1x200x200xf32> to vector<1x200xf32>
    %26 = vector.shape_cast %25 : vector<1x200xf32> to vector<1x200x1xf32>
    %27 = arith.truncf %15 : vector<1x200x128xf32> to vector<1x200x128xbf16>
    "tpu.trace_start"() <{level = 10 : i32, message = "bqk,bkd->bqd"}> : () -> ()
    %cst_17 = arith.constant dense<0.000000e+00> : vector<1x200x128xf32>
    %28 = tpu.matmul %23, %27, %cst_17 {dimension_numbers = #tpu.dot_dimension_numbers<[2], [1], [1], [2], [0, 0, 0, 1, 1, 2], [0], [0]>} : vector<1x200x200xbf16>, vector<1x200x128xbf16>, vector<1x200x128xf32> -> vector<1x200x128xf32>
    "tpu.trace_stop"() : () -> ()
    %29 = tpu.reciprocal %26 {approx = true} : vector<1x200x1xf32> -> vector<1x200x1xf32>
    %30 = vector.broadcast %29 : vector<1x200x1xf32> to vector<1x200x128xf32>
    %31 = arith.mulf %28, %30 : vector<1x200x128xf32>
    %c0_18 = arith.constant 0 : index
    %c0_19 = arith.constant 0 : index
    %c0_20 = arith.constant 0 : index
    %32 = vector.load %arg7[%c0_18, %c0_19, %c0_20] : memref<1x200x128xf32, #tpu.memory_space<vmem>>, vector<1x200x128xf32>
    tpu.vector_store %arg7[%c0_18, %c0_19, %c0_20], %31 {strides = array<i32>} : memref<1x200x128xf32, #tpu.memory_space<vmem>>, vector<1x200x128xf32>,
    return
  }
  func.func @transform_0(%arg0: i32) -> (i32, i32, i32) {
    %c0_i32 = arith.constant 0 : i32
    %c0_i32_0 = arith.constant 0 : i32
    %c0_i32_1 = arith.constant 0 : i32
    return %arg0, %c0_i32, %c0_i32_0 : i32, i32, i32
  }
  func.func @transform_1(%arg0: i32) -> (i32, i32, i32) {
    %c0_i32 = arith.constant 0 : i32
    %c0_i32_0 = arith.constant 0 : i32
    %c0_i32_1 = arith.constant 0 : i32
    return %arg0, %c0_i32, %c0_i32_0 : i32, i32, i32
  }
  func.func @transform_2(%arg0: i32) -> (i32, i32) {
    %c0_i32 = arith.constant 0 : i32
    %c0_i32_0 = arith.constant 0 : i32
    %c0_i32_1 = arith.constant 0 : i32
    return %c0_i32, %c0_i32_0 : i32, i32
  }
  func.func @transform_3(%arg0: i32) -> (i32, i32) {
    %c0_i32 = arith.constant 0 : i32
    %c0_i32_0 = arith.constant 0 : i32
    %c0_i32_1 = arith.constant 0 : i32
    return %c0_i32, %c0_i32_0 : i32, i32
  }
  func.func @transform_4(%arg0: i32) -> (i32, i32) {
    %c0_i32 = arith.constant 0 : i32
    %c0_i32_0 = arith.constant 0 : i32
    %c0_i32_1 = arith.constant 0 : i32
    return %c0_i32, %c0_i32_0 : i32, i32
  }
  func.func @transform_5(%arg0: i32) -> (i32, i32) {
    %c0_i32 = arith.constant 0 : i32
    %c0_i32_0 = arith.constant 0 : i32
    %c0_i32_1 = arith.constant 0 : i32
    return %c0_i32, %c0_i32_0 : i32, i32
  }
  func.func @transform_6(%arg0: i32) -> (i32, i32, i32) {
    %c0_i32 = arith.constant 0 : i32
    %c0_i32_0 = arith.constant 0 : i32
    %c0_i32_1 = arith.constant 0 : i32
    return %arg0, %c0_i32, %c0_i32_0 : i32, i32, i32
  }
}

</mosaic_0001>

<llo_original>
// kernel: cross_attention.1
$region0: #{cross_attention.1}
  #allocation0 [shape = 'u32[]', space=smem, size = 0x4, offset = 0x4, fixed_abs, tag = 'smem constant byte address 0x4 - core index']
  #allocation1 [shape = 'u32[144,128]{1,0:T(1,128)}', space=vmem, size = 0x12000, scoped, tag = 'internal scratch']
  %s0 = inlined_call_operand.hbm [shape: f32[2,200,128], index: 0, kind: input, shape index: {}]
  %s1 = inlined_call_operand.hbm [shape: f32[2,200,128], index: 1, kind: input, shape index: {}]
  %s2 = inlined_call_operand.hbm [shape: bf16[128,128], index: 2, kind: input, shape index: {}]
  %s3 = inlined_call_operand.vmem [shape: f32[1,128], index: 3, kind: input, shape index: {}]
  %s4 = inlined_call_operand.hbm [shape: bf16[128,128], index: 4, kind: input, shape index: {}]
  %s5 = inlined_call_operand.vmem [shape: f32[1,128], index: 5, kind: input, shape index: {}]
  %s6 = inlined_call_operand.hbm [shape: f32[2,200,128], index: 6, kind: output, shape index: {}]
  %s7 = sld [smem:[#allocation0]]
  $region73: #{cross_attention.1} parent=0
    _
  %s9 = ssub.s32 1, %s7
  %s10 = scalar_select 0, %s9, %s7
  $region1: #{cross_attention.1} parent=0
    #allocation2 [shape = 'u8[204800]{0}', space=vmem, size = 0x32000, scoped, tag = 'input window, operand 0']
    #allocation3 [shape = 's32[2]{0}', space=sflag, size = 0x8, scoped, tag = 'scoped memory for cross_attention.1']
    #allocation4 [shape = 's32[2]{0}', space=sflag, size = 0x8, scoped, tag = 'scoped memory for cross_attention.1']
    #allocation5 [shape = 'u8[204800]{0}', space=vmem, size = 0x32000, scoped, tag = 'input window, operand 1']
    #allocation6 [shape = 's32[2]{0}', space=sflag, size = 0x8, scoped, tag = 'scoped memory for cross_attention.1']
    #allocation7 [shape = 'u8[32768]{0}', space=vmem, size = 0x8000, scoped, tag = 'input window, operand 2, single buffered']
    #allocation8 [shape = 'u8[32768]{0}', space=vmem, size = 0x8000, scoped, tag = 'input window, operand 4, single buffered']
    #allocation9 [shape = 's32[1]{0}', space=sflag, size = 0x4, scoped, tag = 'scoped memory for cross_attention.1']
    #allocation10 [shape = 'u8[204800]{0}', space=vmem, size = 0x32000, scoped, tag = 'output window, operand 0']
    %11 = vsyncpa [#allocation3], 0
    %s12 = scalar_lea.sflag [#allocation3], 1
    %13 = vsyncpa %s12, 0
    %14 = vsyncpa [#allocation6], 0
    %s15 = scalar_lea.sflag [#allocation6], 1
    %16 = vsyncpa %s15, 0
    %17 = vsyncpa [#allocation9], 0
    %18 = vsyncpa [#allocation4], 0
    %s19 = scalar_lea.sflag [#allocation4], 1
    %20 = vsyncpa %s19, 0
    loop: start=0, step=1, limit=4
    $region2: #{cross_attention.1} parent=1 // loop_pre_header
      _
    $region3: #{cross_attention.1} parent=1 // loop_header
      %s22 = sphi 0, %s26
      %p23 = scmp.ge.s32.totalorder %s22, 4
      %s32 = sphi 0, %s34
      %s35 = sphi 0, %s32
      %s36 = sphi 0, %s35
      %s52 = sphi 0, %s36
      %s58 = sphi 0, %s60
      %s61 = sphi 0, %s58
      %s62 = sphi 0, %s61
      %s78 = sphi 0, %s62
      %s82 = sphi 0, %s82
      %s84 = sphi 0, %s82
      %s85 = sphi 0, %s84
      %s99 = sphi 0, %s85
      %s103 = sphi 0, %s103
      %s105 = sphi 0, %s103
      %s106 = sphi 0, %s105
      %s120 = sphi 0, %s106
      %s124 = sphi 0, %s124
      %s126 = sphi 0, %s124
      %s127 = sphi 0, %s126
      %s141 = sphi 0, %s127
      %s145 = sphi 0, %s145
      %s147 = sphi 0, %s145
      %s148 = sphi 0, %s147
      %s162 = sphi 0, %s148
      %s168 = sphi 0, %s170
      %s171 = sphi 0, %s168
      %s172 = sphi 0, %s171
      %s188 = sphi 0, %s172
    $region4: #{cross_attention.1} parent=1 // loop_header_branch
      %25 = sbr.rel (%p23) target = $region8
    $region5: #{cross_attention.1} parent=1 // loop_body
      %s27 = ssub.s32 %s22, 1
      %s28 = ssub.s32 %s22, 2
      %s29 = sadd.s32 %s22, 1
      %s30 = ssub.s32 %s22, %s29
      %p31 = scmp.eq.s32.totalorder %s30, 0
      %s33 = sadd.s32 %s32, 1
      %s34 = scalar_select %p31, %s32, %s33
      %p37 = pneg %p31
      %p38 = scmp.eq.s32.totalorder %s22, 1
      %p39 = por %p37, %p38
      %p40 = scmp.ne.s32.totalorder %s32, %s35
      %p41 = scmp.eq.s32.totalorder %s22, 0
      %p42 = por %p40, %p41
      %p43 = scmp.ne.s32.totalorder %s32, %s35
      %p44 = scmp.eq.s32.totalorder %s27, 1
      %p45 = por %p43, %p44
      %p46 = scmp.ne.s32.totalorder %s35, %s36
      %p47 = scmp.eq.s32.totalorder %s27, 0
      %p48 = por %p46, %p47
      %p49 = scmp.ne.s32.totalorder %s35, %s36
      %p50 = scmp.eq.s32.totalorder %s28, 1
      %p51 = por %p49, %p50
      %p53 = scmp.ne.s32.totalorder %s36, %s52
      %p54 = scmp.eq.s32.totalorder %s28, 0
      %p55 = por %p53, %p54
      %s56 = ssub.s32 %s22, %s29
      %p57 = scmp.eq.s32.totalorder %s56, 0
      %s59 = sadd.s32 %s58, 1
      %s60 = scalar_select %p57, %s58, %s59
      %p63 = pneg %p57
      %p64 = scmp.eq.s32.totalorder %s22, 1
      %p65 = por %p63, %p64
      %p66 = scmp.ne.s32.totalorder %s58, %s61
      %p67 = scmp.eq.s32.totalorder %s22, 0
      %p68 = por %p66, %p67
      %p69 = scmp.ne.s32.totalorder %s58, %s61
      %p70 = scmp.eq.s32.totalorder %s27, 1
      %p71 = por %p69, %p70
      %p72 = scmp.ne.s32.totalorder %s61, %s62
      %p73 = scmp.eq.s32.totalorder %s27, 0
      %p74 = por %p72, %p73
      %p75 = scmp.ne.s32.totalorder %s61, %s62
      %p76 = scmp.eq.s32.totalorder %s28, 1
      %p77 = por %p75, %p76
      %p79 = scmp.ne.s32.totalorder %s62, %s78
      %p80 = scmp.eq.s32.totalorder %s28, 0
      %p81 = por %p79, %p80
      %s83 = sadd.s32 %s82, 1
      %p86 = scmp.eq.s32.totalorder %s22, 1
      %p87 = scmp.ne.s32.totalorder %s82, %s84
      %p88 = scmp.eq.s32.totalorder %s22, 0
      %p89 = por %p87, %p88
      %p90 = scmp.ne.s32.totalorder %s82, %s84
      %p91 = scmp.eq.s32.totalorder %s27, 1
      %p92 = por %p90, %p91
      %p93 = scmp.ne.s32.totalorder %s84, %s85
      %p94 = scmp.eq.s32.totalorder %s27, 0
      %p95 = por %p93, %p94
      %p96 = scmp.ne.s32.totalorder %s84, %s85
      %p97 = scmp.eq.s32.totalorder %s28, 1
      %p98 = por %p96, %p97
      %p100 = scmp.ne.s32.totalorder %s85, %s99
      %p101 = scmp.eq.s32.totalorder %s28, 0
      %p102 = por %p100, %p101
      %s104 = sadd.s32 %s103, 1
      %p107 = scmp.eq.s32.totalorder %s22, 1
      %p108 = scmp.ne.s32.totalorder %s103, %s105
      %p109 = scmp.eq.s32.totalorder %s22, 0
      %p110 = por %p108, %p109
      %p111 = scmp.ne.s32.totalorder %s103, %s105
      %p112 = scmp.eq.s32.totalorder %s27, 1
      %p113 = por %p111, %p112
      %p114 = scmp.ne.s32.totalorder %s105, %s106
      %p115 = scmp.eq.s32.totalorder %s27, 0
      %p116 = por %p114, %p115
      %p117 = scmp.ne.s32.totalorder %s105, %s106
      %p118 = scmp.eq.s32.totalorder %s28, 1
      %p119 = por %p117, %p118
      %p121 = scmp.ne.s32.totalorder %s106, %s120
      %p122 = scmp.eq.s32.totalorder %s28, 0
      %p123 = por %p121, %p122
      %s125 = sadd.s32 %s124, 1
      %p128 = scmp.eq.s32.totalorder %s22, 1
      %p129 = scmp.ne.s32.totalorder %s124, %s126
      %p130 = scmp.eq.s32.totalorder %s22, 0
      %p131 = por %p129, %p130
      %p132 = scmp.ne.s32.totalorder %s124, %s126
      %p133 = scmp.eq.s32.totalorder %s27, 1
      %p134 = por %p132, %p133
      %p135 = scmp.ne.s32.totalorder %s126, %s127
      %p136 = scmp.eq.s32.totalorder %s27, 0
      %p137 = por %p135, %p136
      %p138 = scmp.ne.s32.totalorder %s126, %s127
      %p139 = scmp.eq.s32.totalorder %s28, 1
      %p140 = por %p138, %p139
      %p142 = scmp.ne.s32.totalorder %s127, %s141
      %p143 = scmp.eq.s32.totalorder %s28, 0
      %p144 = por %p142, %p143
      %s146 = sadd.s32 %s145, 1
      %p149 = scmp.eq.s32.totalorder %s22, 1
      %p150 = scmp.ne.s32.totalorder %s145, %s147
      %p151 = scmp.eq.s32.totalorder %s22, 0
      %p152 = por %p150, %p151
      %p153 = scmp.ne.s32.totalorder %s145, %s147
      %p154 = scmp.eq.s32.totalorder %s27, 1
      %p155 = por %p153, %p154
      %p156 = scmp.ne.s32.totalorder %s147, %s148
      %p157 = scmp.eq.s32.totalorder %s27, 0
      %p158 = por %p156, %p157
      %p159 = scmp.ne.s32.totalorder %s147, %s148
      %p160 = scmp.eq.s32.totalorder %s28, 1
      %p161 = por %p159, %p160
      %p163 = scmp.ne.s32.totalorder %s148, %s162
      %p164 = scmp.eq.s32.totalorder %s28, 0
      %p165 = por %p163, %p164
      %s166 = ssub.s32 %s22, %s29
      %p167 = scmp.eq.s32.totalorder %s166, 0
      %s169 = sadd.s32 %s168, 1
      %s170 = scalar_select %p167, %s168, %s169
      %p173 = pneg %p167
      %p174 = scmp.eq.s32.totalorder %s22, 1
      %p175 = por %p173, %p174
      %p176 = scmp.ne.s32.totalorder %s168, %s171
      %p177 = scmp.eq.s32.totalorder %s22, 0
      %p178 = por %p176, %p177
      %p179 = scmp.ne.s32.totalorder %s168, %s171
      %p180 = scmp.eq.s32.totalorder %s27, 1
      %p181 = por %p179, %p180
      %p182 = scmp.ne.s32.totalorder %s171, %s172
      %p183 = scmp.eq.s32.totalorder %s27, 0
      %p184 = por %p182, %p183
      %p185 = scmp.ne.s32.totalorder %s171, %s172
      %p186 = scmp.eq.s32.totalorder %s28, 1
      %p187 = por %p185, %p186
      %p189 = scmp.ne.s32.totalorder %s172, %s188
      %p190 = scmp.eq.s32.totalorder %s28, 0
      %p191 = por %p189, %p190
      %p192 = scmp.le.s32.totalorder 1, %s22
      %p193 = scmp.lt.s32.totalorder %s22, 3
      %p194 = pnand %p192, %p193
      %p195 = pneg %p194
      // Predicated region
      $region9: #{cross_attention.1} parent=5 // pred_check
        _
      $region10: #{cross_attention.1} parent=5 // pred_check_branch
        %197 = sbr.rel (%p194) target = $region12
      $region11: #{cross_attention.1} parent=5 // pred_region
        %s198 = ssub.s32 %s22, 1
        // Predicated region
        $region13: #{cross_attention.1} parent=11 // pred_check
          %p199 = pneg %p95
        $region14: #{cross_attention.1} parent=11 // pred_check_branch
          %201 = sbr.rel (%p199) target = $region16
        $region15: #{cross_attention.1} parent=11 // pred_region
          %s203 = ssub.s32 1024, 1024
          %204 = vsyncadd [#allocation6], %s203
          %s205 = sshll.u32 [#allocation7], 4
          %s206 = int_to_ptr.vmem [resolvable:$true] %s205
          %211 = dma.hbm_to_vmem [thread:$0]  %s2, 1024, %s206, [#allocation6], 64, 64, 4
        $region16: #{cross_attention.1} parent=11 // pred_fallthru
          _
        // Predicated region
        $region17: #{cross_attention.1} parent=11 // pred_check
          %p212 = pneg %p116
        $region18: #{cross_attention.1} parent=11 // pred_check_branch
          %214 = sbr.rel (%p212) target = $region20
        $region19: #{cross_attention.1} parent=11 // pred_region
          _
        $region20: #{cross_attention.1} parent=11 // pred_fallthru
          _
        // Predicated region
        $region21: #{cross_attention.1} parent=11 // pred_check
          %p215 = pneg %p137
        $region22: #{cross_attention.1} parent=11 // pred_check_branch
          %217 = sbr.rel (%p215) target = $region24
        $region23: #{cross_attention.1} parent=11 // pred_region
          %s219 = ssub.s32 1024, 1024
          %220 = vsyncadd [#allocation9], %s219
          %s221 = sshll.u32 [#allocation8], 4
          %s222 = int_to_ptr.vmem [resolvable:$true] %s221
          %227 = dma.hbm_to_vmem [thread:$0]  %s4, 1024, %s222, [#allocation9], 64, 64, 4
        $region24: #{cross_attention.1} parent=11 // pred_fallthru
          _
        // Predicated region
        $region25: #{cross_attention.1} parent=11 // pred_check
          %p228 = pneg %p158
        $region26: #{cross_attention.1} parent=11 // pred_check_branch
          %230 = sbr.rel (%p228) target = $region28
        $region27: #{cross_attention.1} parent=11 // pred_region
          _
        $region28: #{cross_attention.1} parent=11 // pred_fallthru
          _
      $region12: #{cross_attention.1} parent=5 // pred_fallthru
        _
      %p231 = scmp.lt.s32.totalorder %s22, 2
      // Predicated region
      $region29: #{cross_attention.1} parent=5 // pred_check
        %p232 = pneg %p231
      $region30: #{cross_attention.1} parent=5 // pred_check_branch
        %234 = sbr.rel (%p232) target = $region32
      $region31: #{cross_attention.1} parent=5 // pred_region
        // Predicated region
        $region33: #{cross_attention.1} parent=31 // pred_check
          %p235 = pneg %p42
        $region34: #{cross_attention.1} parent=31 // pred_check_branch
          %237 = sbr.rel (%p235) target = $region36
        $region35: #{cross_attention.1} parent=31 // pred_region
          %s238 = sand.u32 %s32, 1
          %s239 = scalar_lea.sflag [#allocation3], %s238
          %s240 = sand.u32 %s32, 1
          %s241 = smul.addr %s240, 200
          %s242 = scalar_lea.vmem [#allocation2], %s241
          %s244 = ssub.s32 3200, 3200
          %245 = vsyncadd %s239, %s244
          %s246 = smul.addr %s22, 25
          %s247 = smul.addr %s246, 128
          %s248 = scalar_lea.hbm %s0, %s247
          %s249 = sshll.u32 %s242, 4
          %s250 = int_to_ptr.vmem [resolvable:$true] %s249
          %255 = dma.hbm_to_vmem [thread:$0]  %s248, 3200, %s250, %s239, 128, 128, 8
        $region36: #{cross_attention.1} parent=31 // pred_fallthru
          _
        // Predicated region
        $region37: #{cross_attention.1} parent=31 // pred_check
          %p256 = pneg %p68
        $region38: #{cross_attention.1} parent=31 // pred_check_branch
          %258 = sbr.rel (%p256) target = $region40
        $region39: #{cross_attention.1} parent=31 // pred_region
          %s259 = sand.u32 %s22, 1
          %s260 = scalar_lea.sflag [#allocation6], %s259
          %s261 = sand.u32 %s58, 1
          %s262 = smul.addr %s261, 200
          %s263 = scalar_lea.vmem [#allocation5], %s262
          %s265 = ssub.s32 3200, 3200
          %266 = vsyncadd %s260, %s265
          %s267 = smul.addr %s22, 25
          %s268 = smul.addr %s267, 128
          %s269 = scalar_lea.hbm %s1, %s268
          %s270 = sshll.u32 %s263, 4
          %s271 = int_to_ptr.vmem [resolvable:$true] %s270
          %276 = dma.hbm_to_vmem [thread:$0]  %s269, 3200, %s271, %s260, 128, 128, 8
        $region40: #{cross_attention.1} parent=31 // pred_fallthru
          _
      $region32: #{cross_attention.1} parent=5 // pred_fallthru
        _
      %p277 = scmp.le.s32.totalorder 1, %s22
      %p278 = scmp.lt.s32.totalorder %s22, 3
      %p279 = pnand %p277, %p278
      %p280 = pneg %p279
      // Predicated region
      $region41: #{cross_attention.1} parent=5 // pred_check
        _
      $region42: #{cross_attention.1} parent=5 // pred_check_branch
        %282 = sbr.rel (%p279) target = $region44
      $region43: #{cross_attention.1} parent=5 // pred_region
        %s283 = ssub.s32 %s22, 1
        %s284 = sand.u32 %s35, 1
        %s285 = scalar_lea.sflag [#allocation3], %s284
        %s286 = sand.u32 %s35, 1
        %s287 = smul.addr %s286, 200
        %s288 = scalar_lea.vmem [#allocation2], %s287
        // Predicated region
        $region45: #{cross_attention.1} parent=43 // pred_check
          %p289 = pneg %p48
        $region46: #{cross_attention.1} parent=43 // pred_check_branch
          %291 = sbr.rel (%p289) target = $region48
        $region47: #{cross_attention.1} parent=43 // pred_region
          %292 = dma.done %s285, 3200
        $region48: #{cross_attention.1} parent=43 // pred_fallthru
          _
        %s293 = sand.u32 %s27, 1
        %s294 = scalar_lea.sflag [#allocation6], %s293
        %s295 = sand.u32 %s61, 1
        %s296 = smul.addr %s295, 200
        %s297 = scalar_lea.vmem [#allocation5], %s296
        // Predicated region
        $region49: #{cross_attention.1} parent=43 // pred_check
          %p298 = pneg %p74
        $region50: #{cross_attention.1} parent=43 // pred_check_branch
          %300 = sbr.rel (%p298) target = $region52
        $region51: #{cross_attention.1} parent=43 // pred_region
          %301 = dma.done %s294, 3200
        $region52: #{cross_attention.1} parent=43 // pred_fallthru
          _
        // Predicated region
        $region53: #{cross_attention.1} parent=43 // pred_check
          %p302 = pneg %p95
        $region54: #{cross_attention.1} parent=43 // pred_check_branch
          %304 = sbr.rel (%p302) target = $region56
        $region55: #{cross_attention.1} parent=43 // pred_region
          %305 = dma.done [#allocation6], 1024
        $region56: #{cross_attention.1} parent=43 // pred_fallthru
          _
        // Predicated region
        $region57: #{cross_attention.1} parent=43 // pred_check
          %p306 = pneg %p137
        $region58: #{cross_attention.1} parent=43 // pred_check_branch
          %308 = sbr.rel (%p306) target = $region60
        $region59: #{cross_attention.1} parent=43 // pred_region
          %309 = dma.done [#allocation9], 1024
        $region60: #{cross_attention.1} parent=43 // pred_fallthru
          _
        %s310 = sand.u32 %s35, 1
        %s311 = scalar_lea.sflag [#allocation3], %s310
        %s312 = sand.u32 %s35, 1
        %s313 = smul.addr %s312, 200
        %s314 = scalar_lea.vmem [#allocation2], %s313
        %p315 = pneg %p48
        %p316 = pneg %p45
        %s317 = sand.u32 %s27, 1
        %s318 = scalar_lea.sflag [#allocation6], %s317
        %s319 = sand.u32 %s61, 1
        %s320 = smul.addr %s319, 200
        %s321 = scalar_lea.vmem [#allocation5], %s320
        %p322 = pneg %p74
        %p323 = pneg %p71
        %p324 = pneg %p95
        %p325 = pneg %p92
        %p326 = pneg %p116
        %p327 = pneg %p113
        %p328 = pneg %p137
        %p329 = pneg %p134
        %p330 = pneg %p158
        %p331 = pneg %p155
        %p332 = pneg %p184
        %p333 = pneg %p181
        %s334 = sand.u32 %s171, 1
        %s335 = scalar_lea.sflag [#allocation4], %s334
        %s336 = sand.u32 %s171, 1
        %s337 = smul.addr %s336, 200
        %s338 = scalar_lea.vmem [#allocation10], %s337
        %v340 = vld [vmem:[%s288] sm:$0xff]
        %v341 = vld [vmem:[%s288 + $0x8] sm:$0xff]
        %v342 = vld [vmem:[%s288 + $0x10] sm:$0xff]
        %v343 = vld [vmem:[%s288 + $0x18] sm:$0xff]
        %v344 = vld [vmem:[%s288 + $0x20] sm:$0xff]
        %v345 = vld [vmem:[%s288 + $0x28] sm:$0xff]
        %v346 = vld [vmem:[%s288 + $0x30] sm:$0xff]
        %v347 = vld [vmem:[%s288 + $0x38] sm:$0xff]
        %v348 = vld [vmem:[%s288 + $0x40] sm:$0xff]
        %v349 = vld [vmem:[%s288 + $0x48] sm:$0xff]
        %v350 = vld [vmem:[%s288 + $0x50] sm:$0xff]
        %v351 = vld [vmem:[%s288 + $0x58] sm:$0xff]
        %v352 = vld [vmem:[%s288 + $0x60] sm:$0xff]
        %v353 = vld [vmem:[%s288 + $0x68] sm:$0xff]
        %v354 = vld [vmem:[%s288 + $0x70] sm:$0xff]
        %v355 = vld [vmem:[%s288 + $0x78] sm:$0xff]
        %v356 = vld [vmem:[%s288 + $0x80] sm:$0xff]
        %v357 = vld [vmem:[%s288 + $0x88] sm:$0xff]
        %v358 = vld [vmem:[%s288 + $0x90] sm:$0xff]
        %v359 = vld [vmem:[%s288 + $0x98] sm:$0xff]
        %v360 = vld [vmem:[%s288 + $0xa0] sm:$0xff]
        %v361 = vld [vmem:[%s288 + $0xa8] sm:$0xff]
        %v362 = vld [vmem:[%s288 + $0xb0] sm:$0xff]
        %v363 = vld [vmem:[%s288 + $0xb8] sm:$0xff]
        %v364 = vld [vmem:[%s288 + $0xc0] sm:$0xff]
        %v365 = vpack.c.bf16 %v341, %v340
        %v366 = vpack.c.bf16 %v343, %v342
        %v367 = vpack.c.bf16 %v345, %v344
        %v368 = vpack.c.bf16 %v347, %v346
        %v369 = vpack.c.bf16 %v349, %v348
        %v370 = vpack.c.bf16 %v351, %v350
        %v371 = vpack.c.bf16 %v353, %v352
        %v372 = vpack.c.bf16 %v355, %v354
        %v373 = vpack.c.bf16 %v357, %v356
        %v374 = vpack.c.bf16 %v359, %v358
        %v375 = vpack.c.bf16 %v361, %v360
        %v376 = vpack.c.bf16 %v363, %v362
        %v377 = vpack.c.bf16 %v364, %v364
        %v378 = vld [vmem:[%s297] sm:$0xff]
        %v379 = vld [vmem:[%s297 + $0x8] sm:$0xff]
        %v380 = vld [vmem:[%s297 + $0x10] sm:$0xff]
        %v381 = vld [vmem:[%s297 + $0x18] sm:$0xff]
        %v382 = vld [vmem:[%s297 + $0x20] sm:$0xff]
        %v383 = vld [vmem:[%s297 + $0x28] sm:$0xff]
        %v384 = vld [vmem:[%s297 + $0x30] sm:$0xff]
        %v385 = vld [vmem:[%s297 + $0x38] sm:$0xff]
        %v386 = vld [vmem:[%s297 + $0x40] sm:$0xff]
        %v387 = vld [vmem:[%s297 + $0x48] sm:$0xff]
        %v388 = vld [vmem:[%s297 + $0x50] sm:$0xff]
        %v389 = vld [vmem:[%s297 + $0x58] sm:$0xff]
        %v390 = vld [vmem:[%s297 + $0x60] sm:$0xff]
        %v391 = vld [vmem:[%s297 + $0x68] sm:$0xff]
        %v392 = vld [vmem:[%s297 + $0x70] sm:$0xff]
        %v393 = vld [vmem:[%s297 + $0x78] sm:$0xff]
        %v394 = vld [vmem:[%s297 + $0x80] sm:$0xff]
        %v395 = vld [vmem:[%s297 + $0x88] sm:$0xff]
        %v396 = vld [vmem:[%s297 + $0x90] sm:$0xff]
        %v397 = vld [vmem:[%s297 + $0x98] sm:$0xff]
        %v398 = vld [vmem:[%s297 + $0xa0] sm:$0xff]
        %v399 = vld [vmem:[%s297 + $0xa8] sm:$0xff]
        %v400 = vld [vmem:[%s297 + $0xb0] sm:$0xff]
        %v401 = vld [vmem:[%s297 + $0xb8] sm:$0xff]
        %v402 = vld [vmem:[%s297 + $0xc0] sm:$0xff]
        %v403 = vpack.c.bf16 %v379, %v378
        %v404 = vpack.c.bf16 %v381, %v380
        %v405 = vpack.c.bf16 %v383, %v382
        %v406 = vpack.c.bf16 %v385, %v384
        %v407 = vpack.c.bf16 %v387, %v386
        %v408 = vpack.c.bf16 %v389, %v388
        %v409 = vpack.c.bf16 %v391, %v390
        %v410 = vpack.c.bf16 %v393, %v392
        %v411 = vpack.c.bf16 %v395, %v394
        %v412 = vpack.c.bf16 %v397, %v396
        %v413 = vpack.c.bf16 %v399, %v398
        %v414 = vpack.c.bf16 %v401, %v400
        %v415 = vpack.c.bf16 %v402, %v402
        %v416 = vld [vmem:[#allocation7] sm:$0xf]
        %v417 = vld [vmem:[#allocation7 + $0x4] sm:$0xf]
        %v418 = vld [vmem:[#allocation7 + $0x8] sm:$0xf]
        %v419 = vld [vmem:[#allocation7 + $0xc] sm:$0xf]
        %v420 = vld [vmem:[#allocation7 + $0x10] sm:$0xf]
        %v421 = vld [vmem:[#allocation7 + $0x14] sm:$0xf]
        %v422 = vld [vmem:[#allocation7 + $0x18] sm:$0xf]
        %v423 = vld [vmem:[#allocation7 + $0x1c] sm:$0xf]
        %v424 = vld [vmem:[#allocation7 + $0x20] sm:$0xf]
        %v425 = vld [vmem:[#allocation7 + $0x24] sm:$0xf]
        %v426 = vld [vmem:[#allocation7 + $0x28] sm:$0xf]
        %v427 = vld [vmem:[#allocation7 + $0x2c] sm:$0xf]
        %v428 = vld [vmem:[#allocation7 + $0x30] sm:$0xf]
        %v429 = vld [vmem:[#allocation7 + $0x34] sm:$0xf]
        %v430 = vld [vmem:[#allocation7 + $0x38] sm:$0xf]
        %v431 = vld [vmem:[#allocation7 + $0x3c] sm:$0xf]
        %v432 = vld [vmem:[%s3] sm:$0x1]
        %v433 = vld [vmem:[#allocation8] sm:$0xf]
        %v434 = vld [vmem:[#allocation8 + $0x4] sm:$0xf]
        %v435 = vld [vmem:[#allocation8 + $0x8] sm:$0xf]
        %v436 = vld [vmem:[#allocation8 + $0xc] sm:$0xf]
        %v437 = vld [vmem:[#allocation8 + $0x10] sm:$0xf]
        %v438 = vld [vmem:[#allocation8 + $0x14] sm:$0xf]
        %v439 = vld [vmem:[#allocation8 + $0x18] sm:$0xf]
        %v440 = vld [vmem:[#allocation8 + $0x1c] sm:$0xf]
        %v441 = vld [vmem:[#allocation8 + $0x20] sm:$0xf]
        %v442 = vld [vmem:[#allocation8 + $0x24] sm:$0xf]
        %v443 = vld [vmem:[#allocation8 + $0x28] sm:$0xf]
        %v444 = vld [vmem:[#allocation8 + $0x2c] sm:$0xf]
        %v445 = vld [vmem:[#allocation8 + $0x30] sm:$0xf]
        %v446 = vld [vmem:[#allocation8 + $0x34] sm:$0xf]
        %v447 = vld [vmem:[#allocation8 + $0x38] sm:$0xf]
        %v448 = vld [vmem:[#allocation8 + $0x3c] sm:$0xf]
        %v449 = vld [vmem:[%s5] sm:$0x1]
        %v451 = vlaneseq
        %v452 = vshrl.u32 %v451, 7
        %v453 = vsub.s32 0, %v452
        %v454 = vrot.slane %v432, %v453
        %v472 = vunpack.c.l.b16 %v416
        %v473 = vunpack.c.l.b16 %v417
        %v474 = vunpack.c.l.b16 %v418
        %v475 = vunpack.c.l.b16 %v419
        %v476 = vunpack.c.l.b16 %v420
        %v477 = vunpack.c.l.b16 %v421
        %v478 = vunpack.c.l.b16 %v422
        %v479 = vunpack.c.l.b16 %v423
        %v480 = vunpack.c.l.b16 %v424
        %v481 = vunpack.c.l.b16 %v425
        %v482 = vunpack.c.l.b16 %v426
        %v483 = vunpack.c.l.b16 %v427
        %v484 = vunpack.c.l.b16 %v428
        %v485 = vunpack.c.l.b16 %v429
        %v486 = vunpack.c.l.b16 %v430
        %v487 = vunpack.c.l.b16 %v431
        %v488 = vpack.c.b16 %v473, %v472
        %v489 = vpack.c.b16 %v475, %v474
        %v490 = vpack.c.b16 %v477, %v476
        %v491 = vpack.c.b16 %v479, %v478
        %v492 = vpack.c.b16 %v481, %v480
        %v493 = vpack.c.b16 %v483, %v482
        %v494 = vpack.c.b16 %v485, %v484
        %v495 = vpack.c.b16 %v487, %v486
        %504 = vmatprep.subr.bf16.mxu0 0
        %505 = vmatpush1.bf16.msra.mxu0 %v488
        %506 = vmatprep.subr.bf16.mxu0 0
        %507 = vmatpush1.bf16.msra.mxu0 %v489
        %508 = vmatprep.subr.bf16.mxu0 0
        %509 = vmatpush1.bf16.msra.mxu0 %v490
        %510 = vmatprep.subr.bf16.mxu0 0
        %511 = vmatpush1.bf16.msra.mxu0 %v491
        %512 = vmatprep.subr.bf16.mxu0 0
        %513 = vmatpush1.bf16.msra.mxu0 %v492
        %514 = vmatprep.subr.bf16.mxu0 0
        %515 = vmatpush1.bf16.msra.mxu0 %v493
        %516 = vmatprep.subr.bf16.mxu0 0
        %517 = vmatpush1.bf16.msra.mxu0 %v494
        %518 = vmatprep.subr.bf16.mxu0 0
        %519 = vmatpush1.bf16.msra.mxu0 %v495
        %520 = vmatprep.subr.bf16.mxu0 0
        %521 = vmatpush1.bf16.msra.mxu0 0
        %522 = vmatprep.subr.bf16.mxu0 0
        %523 = vmatpush1.bf16.msra.mxu0 0
        %524 = vmatprep.subr.bf16.mxu0 0
        %525 = vmatpush1.bf16.msra.mxu0 0
        %526 = vmatprep.subr.bf16.mxu0 0
        %527 = vmatpush1.bf16.msra.mxu0 0
        %528 = vmatprep.subr.bf16.mxu0 0
        %529 = vmatpush1.bf16.msra.mxu0 0
        %530 = vmatprep.subr.bf16.mxu0 0
        %531 = vmatpush1.bf16.msra.mxu0 0
        %532 = vmatprep.subr.bf16.mxu0 0
        %533 = vmatpush1.bf16.msra.mxu0 0
        %534 = vmatprep.subr.bf16.mxu0 0
        %535 = vmatpush1.bf16.msra.mxu0 0
        %536 = vmatprep.mubr.bf16.mxu0 0
        %537 = vmatmul.mubr.bf16.gmra.mrb[0].mxu0 %v365
        %v538 = vpop.f32.mrb[0].mxu0
        %v539 = vadd.f32 %v454, %v538
        %v540 = vpop.f32.mrb[0].mxu0
        %v541 = vpop.f32.mrb[0].mxu0
        %v542 = vadd.f32 %v454, %v541
        %v543 = vpop.f32.mrb[0].mxu0
        %544 = vmatprep.mubr.bf16.mxu0 0
        %545 = vmatmul.mubr.bf16.gmra.mrb[0].mxu0 %v366
        %v546 = vpop.f32.mrb[0].mxu0
        %v547 = vadd.f32 %v454, %v546
        %v548 = vpop.f32.mrb[0].mxu0
        %v549 = vpop.f32.mrb[0].mxu0
        %v550 = vadd.f32 %v454, %v549
        %v551 = vpop.f32.mrb[0].mxu0
        %552 = vmatprep.mubr.bf16.mxu0 0
        %553 = vmatmul.mubr.bf16.gmra.mrb[0].mxu0 %v367
        %v554 = vpop.f32.mrb[0].mxu0
        %v555 = vadd.f32 %v454, %v554
        %v556 = vpop.f32.mrb[0].mxu0
        %v557 = vpop.f32.mrb[0].mxu0
        %v558 = vadd.f32 %v454, %v557
        %v559 = vpop.f32.mrb[0].mxu0
        %560 = vmatprep.mubr.bf16.mxu0 0
        %561 = vmatmul.mubr.bf16.gmra.mrb[0].mxu0 %v368
        %v562 = vpop.f32.mrb[0].mxu0
        %v563 = vadd.f32 %v454, %v562
        %v564 = vpop.f32.mrb[0].mxu0
        %v565 = vpop.f32.mrb[0].mxu0
        %v566 = vadd.f32 %v454, %v565
        %v567 = vpop.f32.mrb[0].mxu0
        %568 = vmatprep.mubr.bf16.mxu0 0
        %569 = vmatmul.mubr.bf16.gmra.mrb[0].mxu0 %v369
        %v570 = vpop.f32.mrb[0].mxu0
        %v571 = vadd.f32 %v454, %v570
        %v572 = vpop.f32.mrb[0].mxu0
        %v573 = vpop.f32.mrb[0].mxu0
        %v574 = vadd.f32 %v454, %v573
        %v575 = vpop.f32.mrb[0].mxu0
        %576 = vmatprep.mubr.bf16.mxu0 0
        %577 = vmatmul.mubr.bf16.gmra.mrb[0].mxu0 %v370
        %v578 = vpop.f32.mrb[0].mxu0
        %v579 = vadd.f32 %v454, %v578
        %v580 = vpop.f32.mrb[0].mxu0
        %v581 = vpop.f32.mrb[0].mxu0
        %v582 = vadd.f32 %v454, %v581
        %v583 = vpop.f32.mrb[0].mxu0
        %584 = vmatprep.mubr.bf16.mxu0 0
        %585 = vmatmul.mubr.bf16.gmra.mrb[0].mxu0 %v371
        %v586 = vpop.f32.mrb[0].mxu0
        %v587 = vadd.f32 %v454, %v586
        %v588 = vpop.f32.mrb[0].mxu0
        %v589 = vpop.f32.mrb[0].mxu0
        %v590 = vadd.f32 %v454, %v589
        %v591 = vpop.f32.mrb[0].mxu0
        %592 = vmatprep.mubr.bf16.mxu0 0
        %593 = vmatmul.mubr.bf16.gmra.mrb[0].mxu0 %v372
        %v594 = vpop.f32.mrb[0].mxu0
        %v595 = vadd.f32 %v454, %v594
        %v596 = vpop.f32.mrb[0].mxu0
        %v597 = vpop.f32.mrb[0].mxu0
        %v598 = vadd.f32 %v454, %v597
        %v599 = vpop.f32.mrb[0].mxu0
        %600 = vmatprep.mubr.bf16.mxu0 0
        %601 = vmatmul.mubr.bf16.gmra.mrb[0].mxu0 %v373
        %v602 = vpop.f32.mrb[0].mxu0
        %v603 = vadd.f32 %v454, %v602
        %v604 = vpop.f32.mrb[0].mxu0
        %v605 = vpop.f32.mrb[0].mxu0
        %v606 = vadd.f32 %v454, %v605
        %v607 = vpop.f32.mrb[0].mxu0
        %608 = vmatprep.mubr.bf16.mxu0 0
        %609 = vmatmul.mubr.bf16.gmra.mrb[0].mxu0 %v374
        %v610 = vpop.f32.mrb[0].mxu0
        %v611 = vadd.f32 %v454, %v610
        %v612 = vpop.f32.mrb[0].mxu0
        %v613 = vpop.f32.mrb[0].mxu0
        %v614 = vadd.f32 %v454, %v613
        %v615 = vpop.f32.mrb[0].mxu0
        %616 = vmatprep.mubr.bf16.mxu0 0
        %617 = vmatmul.mubr.bf16.gmra.mrb[0].mxu0 %v375
        %v618 = vpop.f32.mrb[0].mxu0
        %v619 = vadd.f32 %v454, %v618
        %v620 = vpop.f32.mrb[0].mxu0
        %v621 = vpop.f32.mrb[0].mxu0
        %v622 = vadd.f32 %v454, %v621
        %v623 = vpop.f32.mrb[0].mxu0
        %624 = vmatprep.mubr.bf16.mxu0 0
        %625 = vmatmul.mubr.bf16.gmra.mrb[0].mxu0 %v376
        %v626 = vpop.f32.mrb[0].mxu0
        %v627 = vadd.f32 %v454, %v626
        %v628 = vpop.f32.mrb[0].mxu0
        %v629 = vpop.f32.mrb[0].mxu0
        %v630 = vadd.f32 %v454, %v629
        %v631 = vpop.f32.mrb[0].mxu0
        %632 = vmatprep.mubr.bf16.mxu0 0
        %633 = vmatmul.mubr.bf16.gmra.mrb[0].mxu0 %v377
        %v634 = vpop.f32.mrb[0].mxu0
        %v635 = vadd.f32 %v454, %v634
        %v636 = vpop.f32.mrb[0].mxu0
        %v637 = vpop.f32.mrb[0].mxu0
        %v638 = vpop.f32.mrb[0].mxu0
        %639 = vdwg.mxu0
        %v641 = vlaneseq
        %v642 = vshrl.u32 %v641, 7
        %v643 = vsub.s32 0, %v642
        %v644 = vrot.slane %v449, %v643
        %v662 = vunpack.c.l.b16 %v433
        %v663 = vunpack.c.l.b16 %v434
        %v664 = vunpack.c.l.b16 %v435
        %v665 = vunpack.c.l.b16 %v436
        %v666 = vunpack.c.l.b16 %v437
        %v667 = vunpack.c.l.b16 %v438
        %v668 = vunpack.c.l.b16 %v439
        %v669 = vunpack.c.l.b16 %v440
        %v670 = vunpack.c.l.b16 %v441
        %v671 = vunpack.c.l.b16 %v442
        %v672 = vunpack.c.l.b16 %v443
        %v673 = vunpack.c.l.b16 %v444
        %v674 = vunpack.c.l.b16 %v445
        %v675 = vunpack.c.l.b16 %v446
        %v676 = vunpack.c.l.b16 %v447
        %v677 = vunpack.c.l.b16 %v448
        %v678 = vpack.c.b16 %v663, %v662
        %v679 = vpack.c.b16 %v665, %v664
        %v680 = vpack.c.b16 %v667, %v666
        %v681 = vpack.c.b16 %v669, %v668
        %v682 = vpack.c.b16 %v671, %v670
        %v683 = vpack.c.b16 %v673, %v672
        %v684 = vpack.c.b16 %v675, %v674
        %v685 = vpack.c.b16 %v677, %v676
        %694 = vmatprep.subr.bf16.mxu0 0
        %695 = vmatpush1.bf16.msra.mxu0 %v678
        %696 = vmatprep.subr.bf16.mxu0 0
        %697 = vmatpush1.bf16.msra.mxu0 %v679
        %698 = vmatprep.subr.bf16.mxu0 0
        %699 = vmatpush1.bf16.msra.mxu0 %v680
        %700 = vmatprep.subr.bf16.mxu0 0
        %701 = vmatpush1.bf16.msra.mxu0 %v681
        %702 = vmatprep.subr.bf16.mxu0 0
        %703 = vmatpush1.bf16.msra.mxu0 %v682
        %704 = vmatprep.subr.bf16.mxu0 0
        %705 = vmatpush1.bf16.msra.mxu0 %v683
        %706 = vmatprep.subr.bf16.mxu0 0
        %707 = vmatpush1.bf16.msra.mxu0 %v684
        %708 = vmatprep.subr.bf16.mxu0 0
        %709 = vmatpush1.bf16.msra.mxu0 %v685
        %710 = vmatprep.subr.bf16.mxu0 0
        %711 = vmatpush1.bf16.msra.mxu0 0
        %712 = vmatprep.subr.bf16.mxu0 0
        %713 = vmatpush1.bf16.msra.mxu0 0
        %714 = vmatprep.subr.bf16.mxu0 0
        %715 = vmatpush1.bf16.msra.mxu0 0
        %716 = vmatprep.subr.bf16.mxu0 0
        %717 = vmatpush1.bf16.msra.mxu0 0
        %718 = vmatprep.subr.bf16.mxu0 0
        %719 = vmatpush1.bf16.msra.mxu0 0
        %720 = vmatprep.subr.bf16.mxu0 0
        %721 = vmatpush1.bf16.msra.mxu0 0
        %722 = vmatprep.subr.bf16.mxu0 0
        %723 = vmatpush1.bf16.msra.mxu0 0
        %724 = vmatprep.subr.bf16.mxu0 0
        %725 = vmatpush1.bf16.msra.mxu0 0
        %726 = vmatprep.mubr.bf16.mxu0 0
        %727 = vmatmul.mubr.bf16.gmra.mrb[0].mxu0 %v403
        %v728 = vpop.f32.mrb[0].mxu0
        %v729 = vadd.f32 %v644, %v728
        %v730 = vpop.f32.mrb[0].mxu0
        %v731 = vpop.f32.mrb[0].mxu0
        %v732 = vadd.f32 %v644, %v731
        %v733 = vpop.f32.mrb[0].mxu0
        %734 = vmatprep.mubr.bf16.mxu0 0
        %735 = vmatmul.mubr.bf16.gmra.mrb[0].mxu0 %v404
        %v736 = vpop.f32.mrb[0].mxu0
        %v737 = vadd.f32 %v644, %v736
        %v738 = vpop.f32.mrb[0].mxu0
        %v739 = vpop.f32.mrb[0].mxu0
        %v740 = vadd.f32 %v644, %v739
        %v741 = vpop.f32.mrb[0].mxu0
        %742 = vmatprep.mubr.bf16.mxu0 0
        %743 = vmatmul.mubr.bf16.gmra.mrb[0].mxu0 %v405
        %v744 = vpop.f32.mrb[0].mxu0
        %v745 = vadd.f32 %v644, %v744
        %v746 = vpop.f32.mrb[0].mxu0
        %v747 = vpop.f32.mrb[0].mxu0
        %v748 = vadd.f32 %v644, %v747
        %v749 = vpop.f32.mrb[0].mxu0
        %750 = vmatprep.mubr.bf16.mxu0 0
        %751 = vmatmul.mubr.bf16.gmra.mrb[0].mxu0 %v406
        %v752 = vpop.f32.mrb[0].mxu0
        %v753 = vadd.f32 %v644, %v752
        %v754 = vpop.f32.mrb[0].mxu0
        %v755 = vpop.f32.mrb[0].mxu0
        %v756 = vadd.f32 %v644, %v755
        %v757 = vpop.f32.mrb[0].mxu0
        %758 = vmatprep.mubr.bf16.mxu0 0
        %759 = vmatmul.mubr.bf16.gmra.mrb[0].mxu0 %v407
        %v760 = vpop.f32.mrb[0].mxu0
        %v761 = vadd.f32 %v644, %v760
        %v762 = vpop.f32.mrb[0].mxu0
        %v763 = vpop.f32.mrb[0].mxu0
        %v764 = vadd.f32 %v644, %v763
        %v765 = vpop.f32.mrb[0].mxu0
        %766 = vmatprep.mubr.bf16.mxu0 0
        %767 = vmatmul.mubr.bf16.gmra.mrb[0].mxu0 %v408
        %v768 = vpop.f32.mrb[0].mxu0
        %v769 = vadd.f32 %v644, %v768
        %v770 = vpop.f32.mrb[0].mxu0
        %v771 = vpop.f32.mrb[0].mxu0
        %v772 = vadd.f32 %v644, %v771
        %v773 = vpop.f32.mrb[0].mxu0
        %774 = vmatprep.mubr.bf16.mxu0 0
        %775 = vmatmul.mubr.bf16.gmra.mrb[0].mxu0 %v409
        %v776 = vpop.f32.mrb[0].mxu0
        %v777 = vadd.f32 %v644, %v776
        %v778 = vpop.f32.mrb[0].mxu0
        %v779 = vpop.f32.mrb[0].mxu0
        %v780 = vadd.f32 %v644, %v779
        %v781 = vpop.f32.mrb[0].mxu0
        %782 = vmatprep.mubr.bf16.mxu0 0
        %783 = vmatmul.mubr.bf16.gmra.mrb[0].mxu0 %v410
        %v784 = vpop.f32.mrb[0].mxu0
        %v785 = vadd.f32 %v644, %v784
        %v786 = vpop.f32.mrb[0].mxu0
        %v787 = vpop.f32.mrb[0].mxu0
        %v788 = vadd.f32 %v644, %v787
        %v789 = vpop.f32.mrb[0].mxu0
        %790 = vmatprep.mubr.bf16.mxu0 0
        %791 = vmatmul.mubr.bf16.gmra.mrb[0].mxu0 %v411
        %v792 = vpop.f32.mrb[0].mxu0
        %v793 = vadd.f32 %v644, %v792
        %v794 = vpop.f32.mrb[0].mxu0
        %v795 = vpop.f32.mrb[0].mxu0
        %v796 = vadd.f32 %v644, %v795
        %v797 = vpop.f32.mrb[0].mxu0
        %798 = vmatprep.mubr.bf16.mxu0 0
        %799 = vmatmul.mubr.bf16.gmra.mrb[0].mxu0 %v412
        %v800 = vpop.f32.mrb[0].mxu0
        %v801 = vadd.f32 %v644, %v800
        %v802 = vpop.f32.mrb[0].mxu0
        %v803 = vpop.f32.mrb[0].mxu0
        %v804 = vadd.f32 %v644, %v803
        %v805 = vpop.f32.mrb[0].mxu0
        %806 = vmatprep.mubr.bf16.mxu0 0
        %807 = vmatmul.mubr.bf16.gmra.mrb[0].mxu0 %v413
        %v808 = vpop.f32.mrb[0].mxu0
        %v809 = vadd.f32 %v644, %v808
        %v810 = vpop.f32.mrb[0].mxu0
        %v811 = vpop.f32.mrb[0].mxu0
        %v812 = vadd.f32 %v644, %v811
        %v813 = vpop.f32.mrb[0].mxu0
        %814 = vmatprep.mubr.bf16.mxu0 0
        %815 = vmatmul.mubr.bf16.gmra.mrb[0].mxu0 %v414
        %v816 = vpop.f32.mrb[0].mxu0
        %v817 = vadd.f32 %v644, %v816
        %v818 = vpop.f32.mrb[0].mxu0
        %v819 = vpop.f32.mrb[0].mxu0
        %v820 = vadd.f32 %v644, %v819
        %v821 = vpop.f32.mrb[0].mxu0
        %822 = vmatprep.mubr.bf16.mxu0 0
        %823 = vmatmul.mubr.bf16.gmra.mrb[0].mxu0 %v415
        %v824 = vpop.f32.mrb[0].mxu0
        %v825 = vadd.f32 %v644, %v824
        %v826 = vpop.f32.mrb[0].mxu0
        %v827 = vpop.f32.mrb[0].mxu0
        %v828 = vpop.f32.mrb[0].mxu0
        %829 = vdwg.mxu0
        %v830 = vpack.c.bf16 %v542, %v539
        %v831 = vpack.c.bf16 %v550, %v547
        %v832 = vpack.c.bf16 %v558, %v555
        %v833 = vpack.c.bf16 %v566, %v563
        %v834 = vpack.c.bf16 %v574, %v571
        %v835 = vpack.c.bf16 %v582, %v579
        %v836 = vpack.c.bf16 %v590, %v587
        %v837 = vpack.c.bf16 %v598, %v595
        %v838 = vpack.c.bf16 %v606, %v603
        %v839 = vpack.c.bf16 %v614, %v611
        %v840 = vpack.c.bf16 %v622, %v619
        %v841 = vpack.c.bf16 %v630, %v627
        %v842 = vpack.c.bf16 %v635, %v635
        %843 = vmatprep.subr.bf16.mxu0 0
        %844 = vmatpush1.bf16.xpose.msra.mxu0 %v403
        %845 = vmatprep.subr.bf16.mxu0 0
        %846 = vmatpush1.bf16.xpose.msra.mxu0 %v404
        %847 = vmatprep.subr.bf16.mxu0 0
        %848 = vmatpush1.bf16.xpose.msra.mxu0 %v405
        %849 = vmatprep.subr.bf16.mxu0 0
        %850 = vmatpush1.bf16.xpose.msra.mxu0 %v406
        %851 = vmatprep.subr.bf16.mxu0 0
        %852 = vmatpush1.bf16.xpose.msra.mxu0 %v407
        %853 = vmatprep.subr.bf16.mxu0 0
        %854 = vmatpush1.bf16.xpose.msra.mxu0 %v408
        %855 = vmatprep.subr.bf16.mxu0 0
        %856 = vmatpush1.bf16.xpose.msra.mxu0 %v409
        %857 = vmatprep.subr.bf16.mxu0 0
        %858 = vmatpush1.bf16.xpose.msra.mxu0 %v410
        %859 = vmatprep.subr.bf16.mxu0 0
        %860 = vmatpush1.bf16.xpose.msra.mxu0 %v411
        %861 = vmatprep.subr.bf16.mxu0 0
        %862 = vmatpush1.bf16.xpose.msra.mxu0 %v412
        %863 = vmatprep.subr.bf16.mxu0 0
        %864 = vmatpush1.bf16.xpose.msra.mxu0 %v413
        %865 = vmatprep.subr.bf16.mxu0 0
        %866 = vmatpush1.bf16.xpose.msra.mxu0 %v414
        %867 = vmatprep.subr.bf16.mxu0 0
        %868 = vmatpush1.bf16.xpose.msra.mxu0 %v415
        %869 = vmatprep.subr.bf16.mxu0 0
        %870 = vmatpush1.bf16.xpose.msra.mxu0 0
        %871 = vmatprep.subr.bf16.mxu0 0
        %872 = vmatpush1.bf16.xpose.msra.mxu0 0
        %873 = vmatprep.subr.bf16.mxu0 0
        %874 = vmatpush1.bf16.xpose.msra.mxu0 0
        %875 = vmatprep.mubr.bf16.mxu0 0
        %876 = vmatmul.mubr.bf16.gmra.mrb[0].mxu0 %v830
        %v877 = vpop.f32.mrb[0].mxu0
        %v878 = vadd.f32 0.0, %v877
        %v879 = vpop.f32.mrb[0].mxu0
        %v880 = vadd.f32 0.0, %v879
        %v881 = vpop.f32.mrb[0].mxu0
        %v882 = vadd.f32 0.0, %v881
        %v883 = vpop.f32.mrb[0].mxu0
        %v884 = vadd.f32 0.0, %v883
        %885 = vmatprep.mubr.bf16.mxu0 0
        %886 = vmatmul.mubr.bf16.gmra.mrb[0].mxu0 %v831
        %v887 = vpop.f32.mrb[0].mxu0
        %v888 = vadd.f32 0.0, %v887
        %v889 = vpop.f32.mrb[0].mxu0
        %v890 = vadd.f32 0.0, %v889
        %v891 = vpop.f32.mrb[0].mxu0
        %v892 = vadd.f32 0.0, %v891
        %v893 = vpop.f32.mrb[0].mxu0
        %v894 = vadd.f32 0.0, %v893
        %895 = vmatprep.mubr.bf16.mxu0 0
        %896 = vmatmul.mubr.bf16.gmra.mrb[0].mxu0 %v832
        %v897 = vpop.f32.mrb[0].mxu0
        %v898 = vadd.f32 0.0, %v897
        %v899 = vpop.f32.mrb[0].mxu0
        %v900 = vadd.f32 0.0, %v899
        %v901 = vpop.f32.mrb[0].mxu0
        %v902 = vadd.f32 0.0, %v901
        %v903 = vpop.f32.mrb[0].mxu0
        %v904 = vadd.f32 0.0, %v903
        %905 = vmatprep.mubr.bf16.mxu0 0
        %906 = vmatmul.mubr.bf16.gmra.mrb[0].mxu0 %v833
        %v907 = vpop.f32.mrb[0].mxu0
        %v908 = vadd.f32 0.0, %v907
        %v909 = vpop.f32.mrb[0].mxu0
        %v910 = vadd.f32 0.0, %v909
        %v911 = vpop.f32.mrb[0].mxu0
        %v912 = vadd.f32 0.0, %v911
        %v913 = vpop.f32.mrb[0].mxu0
        %v914 = vadd.f32 0.0, %v913
        %915 = vmatprep.mubr.bf16.mxu0 0
        %916 = vmatmul.mubr.bf16.gmra.mrb[0].mxu0 %v834
        %v917 = vpop.f32.mrb[0].mxu0
        %v918 = vadd.f32 0.0, %v917
        %v919 = vpop.f32.mrb[0].mxu0
        %v920 = vadd.f32 0.0, %v919
        %v921 = vpop.f32.mrb[0].mxu0
        %v922 = vadd.f32 0.0, %v921
        %v923 = vpop.f32.mrb[0].mxu0
        %v924 = vadd.f32 0.0, %v923
        %925 = vmatprep.mubr.bf16.mxu0 0
        %926 = vmatmul.mubr.bf16.gmra.mrb[0].mxu0 %v835
        %v927 = vpop.f32.mrb[0].mxu0
        %v928 = vadd.f32 0.0, %v927
        %v929 = vpop.f32.mrb[0].mxu0
        %v930 = vadd.f32 0.0, %v929
        %v931 = vpop.f32.mrb[0].mxu0
        %v932 = vadd.f32 0.0, %v931
        %v933 = vpop.f32.mrb[0].mxu0
        %v934 = vadd.f32 0.0, %v933
        %935 = vmatprep.mubr.bf16.mxu0 0
        %936 = vmatmul.mubr.bf16.gmra.mrb[0].mxu0 %v836
        %v937 = vpop.f32.mrb[0].mxu0
        %v938 = vadd.f32 0.0, %v937
        %v939 = vpop.f32.mrb[0].mxu0
        %v940 = vadd.f32 0.0, %v939
        %v941 = vpop.f32.mrb[0].mxu0
        %v942 = vadd.f32 0.0, %v941
        %v943 = vpop.f32.mrb[0].mxu0
        %v944 = vadd.f32 0.0, %v943
        %945 = vmatprep.mubr.bf16.mxu0 0
        %946 = vmatmul.mubr.bf16.gmra.mrb[0].mxu0 %v837
        %v947 = vpop.f32.mrb[0].mxu0
        %v948 = vadd.f32 0.0, %v947
        %v949 = vpop.f32.mrb[0].mxu0
        %v950 = vadd.f32 0.0, %v949
        %v951 = vpop.f32.mrb[0].mxu0
        %v952 = vadd.f32 0.0, %v951
        %v953 = vpop.f32.mrb[0].mxu0
        %v954 = vadd.f32 0.0, %v953
        %955 = vmatprep.mubr.bf16.mxu0 0
        %956 = vmatmul.mubr.bf16.gmra.mrb[0].mxu0 %v838
        %v957 = vpop.f32.mrb[0].mxu0
        %v958 = vadd.f32 0.0, %v957
        %v959 = vpop.f32.mrb[0].mxu0
        %v960 = vadd.f32 0.0, %v959
        %v961 = vpop.f32.mrb[0].mxu0
        %v962 = vadd.f32 0.0, %v961
        %v963 = vpop.f32.mrb[0].mxu0
        %v964 = vadd.f32 0.0, %v963
        %965 = vmatprep.mubr.bf16.mxu0 0
        %966 = vmatmul.mubr.bf16.gmra.mrb[0].mxu0 %v839
        %v967 = vpop.f32.mrb[0].mxu0
        %v968 = vadd.f32 0.0, %v967
        %v969 = vpop.f32.mrb[0].mxu0
        %v970 = vadd.f32 0.0, %v969
        %v971 = vpop.f32.mrb[0].mxu0
        %v972 = vadd.f32 0.0, %v971
        %v973 = vpop.f32.mrb[0].mxu0
        %v974 = vadd.f32 0.0, %v973
        %975 = vmatprep.mubr.bf16.mxu0 0
        %976 = vmatmul.mubr.bf16.gmra.mrb[0].mxu0 %v840
        %v977 = vpop.f32.mrb[0].mxu0
        %v978 = vadd.f32 0.0, %v977
        %v979 = vpop.f32.mrb[0].mxu0
        %v980 = vadd.f32 0.0, %v979
        %v981 = vpop.f32.mrb[0].mxu0
        %v982 = vadd.f32 0.0, %v981
        %v983 = vpop.f32.mrb[0].mxu0
        %v984 = vadd.f32 0.0, %v983
        %985 = vmatprep.mubr.bf16.mxu0 0
        %986 = vmatmul.mubr.bf16.gmra.mrb[0].mxu0 %v841
        %v987 = vpop.f32.mrb[0].mxu0
        %v988 = vadd.f32 0.0, %v987
        %v989 = vpop.f32.mrb[0].mxu0
        %v990 = vadd.f32 0.0, %v989
        %v991 = vpop.f32.mrb[0].mxu0
        %v992 = vadd.f32 0.0, %v991
        %v993 = vpop.f32.mrb[0].mxu0
        %v994 = vadd.f32 0.0, %v993
        %995 = vmatprep.mubr.bf16.mxu0 0
        %996 = vmatmul.mubr.bf16.gmra.mrb[0].mxu0 %v842
        %v997 = vpop.f32.mrb[0].mxu0
        %v998 = vadd.f32 0.0, %v997
        %v999 = vpop.f32.mrb[0].mxu0
        %v1000 = vadd.f32 0.0, %v999
        %v1001 = vpop.f32.mrb[0].mxu0
        %v1002 = vpop.f32.mrb[0].mxu0
        %1003 = vdwg.mxu0
        %vm1004 = vcmask 588800
        %v1005 = vsel %vm1004, %v880, -inf
        %v1006 = vmax.f32 %v878, %v1005
        %1007 = vmax.xlane.f32.xlu0 %v1006
        %v1008 = vpop.xlane.xlu0 %1007
        %v1009 = vsel %vm1004, %v884, -inf
        %v1010 = vmax.f32 %v882, %v1009
        %1011 = vmax.xlane.f32.xlu0 %v1010
        %v1012 = vpop.xlane.xlu0 %1011
        %v1013 = vsel %vm1004, %v890, -inf
        %v1014 = vmax.f32 %v888, %v1013
        %1015 = vmax.xlane.f32.xlu0 %v1014
        %v1016 = vpop.xlane.xlu0 %1015
        %v1017 = vsel %vm1004, %v894, -inf
        %v1018 = vmax.f32 %v892, %v1017
        %1019 = vmax.xlane.f32.xlu0 %v1018
        %v1020 = vpop.xlane.xlu0 %1019
        %v1021 = vsel %vm1004, %v900, -inf
        %v1022 = vmax.f32 %v898, %v1021
        %1023 = vmax.xlane.f32.xlu0 %v1022
        %v1024 = vpop.xlane.xlu0 %1023
        %v1025 = vsel %vm1004, %v904, -inf
        %v1026 = vmax.f32 %v902, %v1025
        %1027 = vmax.xlane.f32.xlu0 %v1026
        %v1028 = vpop.xlane.xlu0 %1027
        %v1029 = vsel %vm1004, %v910, -inf
        %v1030 = vmax.f32 %v908, %v1029
        %1031 = vmax.xlane.f32.xlu0 %v1030
        %v1032 = vpop.xlane.xlu0 %1031
        %v1033 = vsel %vm1004, %v914, -inf
        %v1034 = vmax.f32 %v912, %v1033
        %1035 = vmax.xlane.f32.xlu0 %v1034
        %v1036 = vpop.xlane.xlu0 %1035
        %v1037 = vsel %vm1004, %v920, -inf
        %v1038 = vmax.f32 %v918, %v1037
        %1039 = vmax.xlane.f32.xlu0 %v1038
        %v1040 = vpop.xlane.xlu0 %1039
        %v1041 = vsel %vm1004, %v924, -inf
        %v1042 = vmax.f32 %v922, %v1041
        %1043 = vmax.xlane.f32.xlu0 %v1042
        %v1044 = vpop.xlane.xlu0 %1043
        %v1045 = vsel %vm1004, %v930, -inf
        %v1046 = vmax.f32 %v928, %v1045
        %1047 = vmax.xlane.f32.xlu0 %v1046
        %v1048 = vpop.xlane.xlu0 %1047
        %v1049 = vsel %vm1004, %v934, -inf
        %v1050 = vmax.f32 %v932, %v1049
        %1051 = vmax.xlane.f32.xlu0 %v1050
        %v1052 = vpop.xlane.xlu0 %1051
        %v1053 = vsel %vm1004, %v940, -inf
        %v1054 = vmax.f32 %v938, %v1053
        %1055 = vmax.xlane.f32.xlu0 %v1054
        %v1056 = vpop.xlane.xlu0 %1055
        %v1057 = vsel %vm1004, %v944, -inf
        %v1058 = vmax.f32 %v942, %v1057
        %1059 = vmax.xlane.f32.xlu0 %v1058
        %v1060 = vpop.xlane.xlu0 %1059
        %v1061 = vsel %vm1004, %v950, -inf
        %v1062 = vmax.f32 %v948, %v1061
        %1063 = vmax.xlane.f32.xlu0 %v1062
        %v1064 = vpop.xlane.xlu0 %1063
        %v1065 = vsel %vm1004, %v954, -inf
        %v1066 = vmax.f32 %v952, %v1065
        %1067 = vmax.xlane.f32.xlu0 %v1066
        %v1068 = vpop.xlane.xlu0 %1067
        %v1069 = vsel %vm1004, %v960, -inf
        %v1070 = vmax.f32 %v958, %v1069
        %1071 = vmax.xlane.f32.xlu0 %v1070
        %v1072 = vpop.xlane.xlu0 %1071
        %v1073 = vsel %vm1004, %v964, -inf
        %v1074 = vmax.f32 %v962, %v1073
        %1075 = vmax.xlane.f32.xlu0 %v1074
        %v1076 = vpop.xlane.xlu0 %1075
        %v1077 = vsel %vm1004, %v970, -inf
        %v1078 = vmax.f32 %v968, %v1077
        %1079 = vmax.xlane.f32.xlu0 %v1078
        %v1080 = vpop.xlane.xlu0 %1079
        %v1081 = vsel %vm1004, %v974, -inf
        %v1082 = vmax.f32 %v972, %v1081
        %1083 = vmax.xlane.f32.xlu0 %v1082
        %v1084 = vpop.xlane.xlu0 %1083
        %v1085 = vsel %vm1004, %v980, -inf
        %v1086 = vmax.f32 %v978, %v1085
        %1087 = vmax.xlane.f32.xlu0 %v1086
        %v1088 = vpop.xlane.xlu0 %1087
        %v1089 = vsel %vm1004, %v984, -inf
        %v1090 = vmax.f32 %v982, %v1089
        %1091 = vmax.xlane.f32.xlu0 %v1090
        %v1092 = vpop.xlane.xlu0 %1091
        %v1093 = vsel %vm1004, %v990, -inf
        %v1094 = vmax.f32 %v988, %v1093
        %1095 = vmax.xlane.f32.xlu0 %v1094
        %v1096 = vpop.xlane.xlu0 %1095
        %v1097 = vsel %vm1004, %v994, -inf
        %v1098 = vmax.f32 %v992, %v1097
        %1099 = vmax.xlane.f32.xlu0 %v1098
        %v1100 = vpop.xlane.xlu0 %1099
        %v1101 = vsel %vm1004, %v1000, -inf
        %v1102 = vmax.f32 %v998, %v1101
        %1103 = vmax.xlane.f32.xlu0 %v1102
        %v1104 = vpop.xlane.xlu0 %1103
        %v1105 = vsub.f32 %v878, %v1008
        %v1106 = vsub.f32 %v880, %v1008
        %v1107 = vsub.f32 %v882, %v1012
        %v1108 = vsub.f32 %v884, %v1012
        %v1109 = vsub.f32 %v888, %v1016
        %v1110 = vsub.f32 %v890, %v1016
        %v1111 = vsub.f32 %v892, %v1020
        %v1112 = vsub.f32 %v894, %v1020
        %v1113 = vsub.f32 %v898, %v1024
        %v1114 = vsub.f32 %v900, %v1024
        %v1115 = vsub.f32 %v902, %v1028
        %v1116 = vsub.f32 %v904, %v1028
        %v1117 = vsub.f32 %v908, %v1032
        %v1118 = vsub.f32 %v910, %v1032
        %v1119 = vsub.f32 %v912, %v1036
        %v1120 = vsub.f32 %v914, %v1036
        %v1121 = vsub.f32 %v918, %v1040
        %v1122 = vsub.f32 %v920, %v1040
        %v1123 = vsub.f32 %v922, %v1044
        %v1124 = vsub.f32 %v924, %v1044
        %v1125 = vsub.f32 %v928, %v1048
        %v1126 = vsub.f32 %v930, %v1048
        %v1127 = vsub.f32 %v932, %v1052
        %v1128 = vsub.f32 %v934, %v1052
        %v1129 = vsub.f32 %v938, %v1056
        %v1130 = vsub.f32 %v940, %v1056
        %v1131 = vsub.f32 %v942, %v1060
        %v1132 = vsub.f32 %v944, %v1060
        %v1133 = vsub.f32 %v948, %v1064
        %v1134 = vsub.f32 %v950, %v1064
        %v1135 = vsub.f32 %v952, %v1068
        %v1136 = vsub.f32 %v954, %v1068
        %v1137 = vsub.f32 %v958, %v1072
        %v1138 = vsub.f32 %v960, %v1072
        %v1139 = vsub.f32 %v962, %v1076
        %v1140 = vsub.f32 %v964, %v1076
        %v1141 = vsub.f32 %v968, %v1080
        %v1142 = vsub.f32 %v970, %v1080
        %v1143 = vsub.f32 %v972, %v1084
        %v1144 = vsub.f32 %v974, %v1084
        %v1145 = vsub.f32 %v978, %v1088
        %v1146 = vsub.f32 %v980, %v1088
        %v1147 = vsub.f32 %v982, %v1092
        %v1148 = vsub.f32 %v984, %v1092
        %v1149 = vsub.f32 %v988, %v1096
        %v1150 = vsub.f32 %v990, %v1096
        %v1151 = vsub.f32 %v992, %v1100
        %v1152 = vsub.f32 %v994, %v1100
        %v1153 = vsub.f32 %v998, %v1104
        %v1154 = vsub.f32 %v1000, %v1104
        %v1155 = vpack.c.bf16 %v1107, %v1105
        %v1156 = vpack.c.bf16 %v1108, %v1106
        %v1157 = vpack.c.bf16 %v1111, %v1109
        %v1158 = vpack.c.bf16 %v1112, %v1110
        %v1159 = vpack.c.bf16 %v1115, %v1113
        %v1160 = vpack.c.bf16 %v1116, %v1114
        %v1161 = vpack.c.bf16 %v1119, %v1117
        %v1162 = vpack.c.bf16 %v1120, %v1118
        %v1163 = vpack.c.bf16 %v1123, %v1121
        %v1164 = vpack.c.bf16 %v1124, %v1122
        %v1165 = vpack.c.bf16 %v1127, %v1125
        %v1166 = vpack.c.bf16 %v1128, %v1126
        %v1167 = vpack.c.bf16 %v1131, %v1129
        %v1168 = vpack.c.bf16 %v1132, %v1130
        %v1169 = vpack.c.bf16 %v1135, %v1133
        %v1170 = vpack.c.bf16 %v1136, %v1134
        %v1171 = vpack.c.bf16 %v1139, %v1137
        %v1172 = vpack.c.bf16 %v1140, %v1138
        %v1173 = vpack.c.bf16 %v1143, %v1141
        %v1174 = vpack.c.bf16 %v1144, %v1142
        %v1175 = vpack.c.bf16 %v1147, %v1145
        %v1176 = vpack.c.bf16 %v1148, %v1146
        %v1177 = vpack.c.bf16 %v1151, %v1149
        %v1178 = vpack.c.bf16 %v1152, %v1150
        %v1179 = vpack.c.bf16 %v1153, %v1153
        %v1180 = vpack.c.bf16 %v1154, %v1154
        %v1182 = vmul.bf16 %v1155, 1069105081
        %v1183 = vpow.bf16.pop %v1182
        %v1185 = vmul.bf16 %v1156, 1069105081
        %v1186 = vpow.bf16.pop %v1185
        %v1188 = vmul.bf16 %v1157, 1069105081
        %v1189 = vpow.bf16.pop %v1188
        %v1191 = vmul.bf16 %v1158, 1069105081
        %v1192 = vpow.bf16.pop %v1191
        %v1194 = vmul.bf16 %v1159, 1069105081
        %v1195 = vpow.bf16.pop %v1194
        %v1197 = vmul.bf16 %v1160, 1069105081
        %v1198 = vpow.bf16.pop %v1197
        %v1200 = vmul.bf16 %v1161, 1069105081
        %v1201 = vpow.bf16.pop %v1200
        %v1203 = vmul.bf16 %v1162, 1069105081
        %v1204 = vpow.bf16.pop %v1203
        %v1206 = vmul.bf16 %v1163, 1069105081
        %v1207 = vpow.bf16.pop %v1206
        %v1209 = vmul.bf16 %v1164, 1069105081
        %v1210 = vpow.bf16.pop %v1209
        %v1212 = vmul.bf16 %v1165, 1069105081
        %v1213 = vpow.bf16.pop %v1212
        %v1215 = vmul.bf16 %v1166, 1069105081
        %v1216 = vpow.bf16.pop %v1215
        %v1218 = vmul.bf16 %v1167, 1069105081
        %v1219 = vpow.bf16.pop %v1218
        %v1221 = vmul.bf16 %v1168, 1069105081
        %v1222 = vpow.bf16.pop %v1221
        %v1224 = vmul.bf16 %v1169, 1069105081
        %v1225 = vpow.bf16.pop %v1224
        %v1227 = vmul.bf16 %v1170, 1069105081
        %v1228 = vpow.bf16.pop %v1227
        %v1230 = vmul.bf16 %v1171, 1069105081
        %v1231 = vpow.bf16.pop %v1230
        %v1233 = vmul.bf16 %v1172, 1069105081
        %v1234 = vpow.bf16.pop %v1233
        %v1236 = vmul.bf16 %v1173, 1069105081
        %v1237 = vpow.bf16.pop %v1236
        %v1239 = vmul.bf16 %v1174, 1069105081
        %v1240 = vpow.bf16.pop %v1239
        %v1242 = vmul.bf16 %v1175, 1069105081
        %v1243 = vpow.bf16.pop %v1242
        %v1245 = vmul.bf16 %v1176, 1069105081
        %v1246 = vpow.bf16.pop %v1245
        %v1248 = vmul.bf16 %v1177, 1069105081
        %v1249 = vpow.bf16.pop %v1248
        %v1251 = vmul.bf16 %v1178, 1069105081
        %v1252 = vpow.bf16.pop %v1251
        %v1254 = vmul.bf16 %v1179, 1069105081
        %v1255 = vpow.bf16.pop %v1254
        %v1257 = vmul.bf16 %v1180, 1069105081
        %v1258 = vpow.bf16.pop %v1257
        %v1259 = vunpack.c.l.bf16 %v1183
        %v1260 = vunpack.c.l.bf16 %v1186
        %v1261 = vunpack.c.h.bf16 %v1183
        %v1262 = vunpack.c.h.bf16 %v1186
        %v1263 = vunpack.c.l.bf16 %v1189
        %v1264 = vunpack.c.l.bf16 %v1192
        %v1265 = vunpack.c.h.bf16 %v1189
        %v1266 = vunpack.c.h.bf16 %v1192
        %v1267 = vunpack.c.l.bf16 %v1195
        %v1268 = vunpack.c.l.bf16 %v1198
        %v1269 = vunpack.c.h.bf16 %v1195
        %v1270 = vunpack.c.h.bf16 %v1198
        %v1271 = vunpack.c.l.bf16 %v1201
        %v1272 = vunpack.c.l.bf16 %v1204
        %v1273 = vunpack.c.h.bf16 %v1201
        %v1274 = vunpack.c.h.bf16 %v1204
        %v1275 = vunpack.c.l.bf16 %v1207
        %v1276 = vunpack.c.l.bf16 %v1210
        %v1277 = vunpack.c.h.bf16 %v1207
        %v1278 = vunpack.c.h.bf16 %v1210
        %v1279 = vunpack.c.l.bf16 %v1213
        %v1280 = vunpack.c.l.bf16 %v1216
        %v1281 = vunpack.c.h.bf16 %v1213
        %v1282 = vunpack.c.h.bf16 %v1216
        %v1283 = vunpack.c.l.bf16 %v1219
        %v1284 = vunpack.c.l.bf16 %v1222
        %v1285 = vunpack.c.h.bf16 %v1219
        %v1286 = vunpack.c.h.bf16 %v1222
        %v1287 = vunpack.c.l.bf16 %v1225
        %v1288 = vunpack.c.l.bf16 %v1228
        %v1289 = vunpack.c.h.bf16 %v1225
        %v1290 = vunpack.c.h.bf16 %v1228
        %v1291 = vunpack.c.l.bf16 %v1231
        %v1292 = vunpack.c.l.bf16 %v1234
        %v1293 = vunpack.c.h.bf16 %v1231
        %v1294 = vunpack.c.h.bf16 %v1234
        %v1295 = vunpack.c.l.bf16 %v1237
        %v1296 = vunpack.c.l.bf16 %v1240
        %v1297 = vunpack.c.h.bf16 %v1237
        %v1298 = vunpack.c.h.bf16 %v1240
        %v1299 = vunpack.c.l.bf16 %v1243
        %v1300 = vunpack.c.l.bf16 %v1246
        %v1301 = vunpack.c.h.bf16 %v1243
        %v1302 = vunpack.c.h.bf16 %v1246
        %v1303 = vunpack.c.l.bf16 %v1249
        %v1304 = vunpack.c.l.bf16 %v1252
        %v1305 = vunpack.c.h.bf16 %v1249
        %v1306 = vunpack.c.h.bf16 %v1252
        %v1307 = vunpack.c.l.bf16 %v1255
        %v1308 = vunpack.c.l.bf16 %v1258
        %v1309 = vsel %vm1004, %v1260, 0.0
        %v1310 = vadd.f32 %v1259, %v1309
        %1311 = vadd.xlane.f32.xlu0 %v1310
        %v1312 = vpop.xlane.xlu0 %1311
        %v1313 = vsel %vm1004, %v1262, 0.0
        %v1314 = vadd.f32 %v1261, %v1313
        %1315 = vadd.xlane.f32.xlu0 %v1314
        %v1316 = vpop.xlane.xlu0 %1315
        %v1317 = vsel %vm1004, %v1264, 0.0
        %v1318 = vadd.f32 %v1263, %v1317
        %1319 = vadd.xlane.f32.xlu0 %v1318
        %v1320 = vpop.xlane.xlu0 %1319
        %v1321 = vsel %vm1004, %v1266, 0.0
        %v1322 = vadd.f32 %v1265, %v1321
        %1323 = vadd.xlane.f32.xlu0 %v1322
        %v1324 = vpop.xlane.xlu0 %1323
        %v1325 = vsel %vm1004, %v1268, 0.0
        %v1326 = vadd.f32 %v1267, %v1325
        %1327 = vadd.xlane.f32.xlu0 %v1326
        %v1328 = vpop.xlane.xlu0 %1327
        %v1329 = vsel %vm1004, %v1270, 0.0
        %v1330 = vadd.f32 %v1269, %v1329
        %1331 = vadd.xlane.f32.xlu0 %v1330
        %v1332 = vpop.xlane.xlu0 %1331
        %v1333 = vsel %vm1004, %v1272, 0.0
        %v1334 = vadd.f32 %v1271, %v1333
        %1335 = vadd.xlane.f32.xlu0 %v1334
        %v1336 = vpop.xlane.xlu0 %1335
        %v1337 = vsel %vm1004, %v1274, 0.0
        %v1338 = vadd.f32 %v1273, %v1337
        %1339 = vadd.xlane.f32.xlu0 %v1338
        %v1340 = vpop.xlane.xlu0 %1339
        %v1341 = vsel %vm1004, %v1276, 0.0
        %v1342 = vadd.f32 %v1275, %v1341
        %1343 = vadd.xlane.f32.xlu0 %v1342
        %v1344 = vpop.xlane.xlu0 %1343
        %v1345 = vsel %vm1004, %v1278, 0.0
        %v1346 = vadd.f32 %v1277, %v1345
        %1347 = vadd.xlane.f32.xlu0 %v1346
        %v1348 = vpop.xlane.xlu0 %1347
        %v1349 = vsel %vm1004, %v1280, 0.0
        %v1350 = vadd.f32 %v1279, %v1349
        %1351 = vadd.xlane.f32.xlu0 %v1350
        %v1352 = vpop.xlane.xlu0 %1351
        %v1353 = vsel %vm1004, %v1282, 0.0
        %v1354 = vadd.f32 %v1281, %v1353
        %1355 = vadd.xlane.f32.xlu0 %v1354
        %v1356 = vpop.xlane.xlu0 %1355
        %v1357 = vsel %vm1004, %v1284, 0.0
        %v1358 = vadd.f32 %v1283, %v1357
        %1359 = vadd.xlane.f32.xlu0 %v1358
        %v1360 = vpop.xlane.xlu0 %1359
        %v1361 = vsel %vm1004, %v1286, 0.0
        %v1362 = vadd.f32 %v1285, %v1361
        %1363 = vadd.xlane.f32.xlu0 %v1362
        %v1364 = vpop.xlane.xlu0 %1363
        %v1365 = vsel %vm1004, %v1288, 0.0
        %v1366 = vadd.f32 %v1287, %v1365
        %1367 = vadd.xlane.f32.xlu0 %v1366
        %v1368 = vpop.xlane.xlu0 %1367
        %v1369 = vsel %vm1004, %v1290, 0.0
        %v1370 = vadd.f32 %v1289, %v1369
        %1371 = vadd.xlane.f32.xlu0 %v1370
        %v1372 = vpop.xlane.xlu0 %1371
        %v1373 = vsel %vm1004, %v1292, 0.0
        %v1374 = vadd.f32 %v1291, %v1373
        %1375 = vadd.xlane.f32.xlu0 %v1374
        %v1376 = vpop.xlane.xlu0 %1375
        %v1377 = vsel %vm1004, %v1294, 0.0
        %v1378 = vadd.f32 %v1293, %v1377
        %1379 = vadd.xlane.f32.xlu0 %v1378
        %v1380 = vpop.xlane.xlu0 %1379
        %v1381 = vsel %vm1004, %v1296, 0.0
        %v1382 = vadd.f32 %v1295, %v1381
        %1383 = vadd.xlane.f32.xlu0 %v1382
        %v1384 = vpop.xlane.xlu0 %1383
        %v1385 = vsel %vm1004, %v1298, 0.0
        %v1386 = vadd.f32 %v1297, %v1385
        %1387 = vadd.xlane.f32.xlu0 %v1386
        %v1388 = vpop.xlane.xlu0 %1387
        %v1389 = vsel %vm1004, %v1300, 0.0
        %v1390 = vadd.f32 %v1299, %v1389
        %1391 = vadd.xlane.f32.xlu0 %v1390
        %v1392 = vpop.xlane.xlu0 %1391
        %v1393 = vsel %vm1004, %v1302, 0.0
        %v1394 = vadd.f32 %v1301, %v1393
        %1395 = vadd.xlane.f32.xlu0 %v1394
        %v1396 = vpop.xlane.xlu0 %1395
        %v1397 = vsel %vm1004, %v1304, 0.0
        %v1398 = vadd.f32 %v1303, %v1397
        %1399 = vadd.xlane.f32.xlu0 %v1398
        %v1400 = vpop.xlane.xlu0 %1399
        %v1401 = vsel %vm1004, %v1306, 0.0
        %v1402 = vadd.f32 %v1305, %v1401
        %1403 = vadd.xlane.f32.xlu0 %v1402
        %v1404 = vpop.xlane.xlu0 %1403
        %v1405 = vsel %vm1004, %v1308, 0.0
        %v1406 = vadd.f32 %v1307, %v1405
        %1407 = vadd.xlane.f32.xlu0 %v1406
        %v1408 = vpop.xlane.xlu0 %1407
        %v1409 = vpack.c.bf16 %v732, %v729
        %v1410 = vpack.c.bf16 %v740, %v737
        %v1411 = vpack.c.bf16 %v748, %v745
        %v1412 = vpack.c.bf16 %v756, %v753
        %v1413 = vpack.c.bf16 %v764, %v761
        %v1414 = vpack.c.bf16 %v772, %v769
        %v1415 = vpack.c.bf16 %v780, %v777
        %v1416 = vpack.c.bf16 %v788, %v785
        %v1417 = vpack.c.bf16 %v796, %v793
        %v1418 = vpack.c.bf16 %v804, %v801
        %v1419 = vpack.c.bf16 %v812, %v809
        %v1420 = vpack.c.bf16 %v820, %v817
        %v1421 = vpack.c.bf16 %v825, %v825
        %v1423 = vsel %vm1004, %v1186, 0
        %v1426 = vsel %vm1004, %v1192, 0
        %v1429 = vsel %vm1004, %v1198, 0
        %v1432 = vsel %vm1004, %v1204, 0
        %v1435 = vsel %vm1004, %v1210, 0
        %v1438 = vsel %vm1004, %v1216, 0
        %v1441 = vsel %vm1004, %v1222, 0
        %v1444 = vsel %vm1004, %v1228, 0
        %v1447 = vsel %vm1004, %v1234, 0
        %v1450 = vsel %vm1004, %v1240, 0
        %v1453 = vsel %vm1004, %v1246, 0
        %v1456 = vsel %vm1004, %v1252, 0
        %v1459 = vsel %vm1004, %v1258, 0
        %vm1461 = vcmask 1043456
        %v1463 = vsel %vm1461, %v1421, 0
        %1465 = vmatprep.subr.bf16.mxu0 0
        %1466 = vmatpush1.bf16.msra.mxu0 %v1409
        %1467 = vmatprep.subr.bf16.mxu0 0
        %1468 = vmatpush1.bf16.msra.mxu0 %v1410
        %1469 = vmatprep.subr.bf16.mxu0 0
        %1470 = vmatpush1.bf16.msra.mxu0 %v1411
        %1471 = vmatprep.subr.bf16.mxu0 0
        %1472 = vmatpush1.bf16.msra.mxu0 %v1412
        %1473 = vmatprep.subr.bf16.mxu0 0
        %1474 = vmatpush1.bf16.msra.mxu0 %v1413
        %1475 = vmatprep.subr.bf16.mxu0 0
        %1476 = vmatpush1.bf16.msra.mxu0 %v1414
        %1477 = vmatprep.subr.bf16.mxu0 0
        %1478 = vmatpush1.bf16.msra.mxu0 %v1415
        %1479 = vmatprep.subr.bf16.mxu0 0
        %1480 = vmatpush1.bf16.msra.mxu0 %v1416
        %1481 = vmatprep.subr.bf16.mxu0 0
        %1482 = vmatpush1.bf16.msra.mxu0 %v1417
        %1483 = vmatprep.subr.bf16.mxu0 0
        %1484 = vmatpush1.bf16.msra.mxu0 %v1418
        %1485 = vmatprep.subr.bf16.mxu0 0
        %1486 = vmatpush1.bf16.msra.mxu0 %v1419
        %1487 = vmatprep.subr.bf16.mxu0 0
        %1488 = vmatpush1.bf16.msra.mxu0 %v1420
        %1489 = vmatprep.subr.bf16.mxu0 0
        %1490 = vmatpush1.bf16.msra.mxu0 %v1463
        %1491 = vmatprep.subr.bf16.mxu0 0
        %1492 = vmatpush1.bf16.msra.mxu0 0
        %1493 = vmatprep.subr.bf16.mxu0 0
        %1494 = vmatpush1.bf16.msra.mxu0 0
        %1495 = vmatprep.subr.bf16.mxu0 0
        %1496 = vmatpush1.bf16.msra.mxu0 0
        %1497 = vmatprep.mubr.bf16.mxu0 %v1423
        %1498 = vmatmul.mubr.bf16.gmra.mrb[0].mxu0 %v1183
        %v1499 = vpop.f32.mrb[0].mxu0
        %v1500 = vadd.f32 0.0, %v1499
        %v1501 = vpop.f32.mrb[0].mxu0
        %v1502 = vpop.f32.mrb[0].mxu0
        %v1503 = vadd.f32 0.0, %v1502
        %v1504 = vpop.f32.mrb[0].mxu0
        %1505 = vmatprep.mubr.bf16.mxu0 %v1426
        %1506 = vmatmul.mubr.bf16.gmra.mrb[0].mxu0 %v1189
        %v1507 = vpop.f32.mrb[0].mxu0
        %v1508 = vadd.f32 0.0, %v1507
        %v1509 = vpop.f32.mrb[0].mxu0
        %v1510 = vpop.f32.mrb[0].mxu0
        %v1511 = vadd.f32 0.0, %v1510
        %v1512 = vpop.f32.mrb[0].mxu0
        %1513 = vmatprep.mubr.bf16.mxu0 %v1429
        %1514 = vmatmul.mubr.bf16.gmra.mrb[0].mxu0 %v1195
        %v1515 = vpop.f32.mrb[0].mxu0
        %v1516 = vadd.f32 0.0, %v1515
        %v1517 = vpop.f32.mrb[0].mxu0
        %v1518 = vpop.f32.mrb[0].mxu0
        %v1519 = vadd.f32 0.0, %v1518
        %v1520 = vpop.f32.mrb[0].mxu0
        %1521 = vmatprep.mubr.bf16.mxu0 %v1432
        %1522 = vmatmul.mubr.bf16.gmra.mrb[0].mxu0 %v1201
        %v1523 = vpop.f32.mrb[0].mxu0
        %v1524 = vadd.f32 0.0, %v1523
        %v1525 = vpop.f32.mrb[0].mxu0
        %v1526 = vpop.f32.mrb[0].mxu0
        %v1527 = vadd.f32 0.0, %v1526
        %v1528 = vpop.f32.mrb[0].mxu0
        %1529 = vmatprep.mubr.bf16.mxu0 %v1435
        %1530 = vmatmul.mubr.bf16.gmra.mrb[0].mxu0 %v1207
        %v1531 = vpop.f32.mrb[0].mxu0
        %v1532 = vadd.f32 0.0, %v1531
        %v1533 = vpop.f32.mrb[0].mxu0
        %v1534 = vpop.f32.mrb[0].mxu0
        %v1535 = vadd.f32 0.0, %v1534
        %v1536 = vpop.f32.mrb[0].mxu0
        %1537 = vmatprep.mubr.bf16.mxu0 %v1438
        %1538 = vmatmul.mubr.bf16.gmra.mrb[0].mxu0 %v1213
        %v1539 = vpop.f32.mrb[0].mxu0
        %v1540 = vadd.f32 0.0, %v1539
        %v1541 = vpop.f32.mrb[0].mxu0
        %v1542 = vpop.f32.mrb[0].mxu0
        %v1543 = vadd.f32 0.0, %v1542
        %v1544 = vpop.f32.mrb[0].mxu0
        %1545 = vmatprep.mubr.bf16.mxu0 %v1441
        %1546 = vmatmul.mubr.bf16.gmra.mrb[0].mxu0 %v1219
        %v1547 = vpop.f32.mrb[0].mxu0
        %v1548 = vadd.f32 0.0, %v1547
        %v1549 = vpop.f32.mrb[0].mxu0
        %v1550 = vpop.f32.mrb[0].mxu0
        %v1551 = vadd.f32 0.0, %v1550
        %v1552 = vpop.f32.mrb[0].mxu0
        %1553 = vmatprep.mubr.bf16.mxu0 %v1444
        %1554 = vmatmul.mubr.bf16.gmra.mrb[0].mxu0 %v1225
        %v1555 = vpop.f32.mrb[0].mxu0
        %v1556 = vadd.f32 0.0, %v1555
        %v1557 = vpop.f32.mrb[0].mxu0
        %v1558 = vpop.f32.mrb[0].mxu0
        %v1559 = vadd.f32 0.0, %v1558
        %v1560 = vpop.f32.mrb[0].mxu0
        %1561 = vmatprep.mubr.bf16.mxu0 %v1447
        %1562 = vmatmul.mubr.bf16.gmra.mrb[0].mxu0 %v1231
        %v1563 = vpop.f32.mrb[0].mxu0
        %v1564 = vadd.f32 0.0, %v1563
        %v1565 = vpop.f32.mrb[0].mxu0
        %v1566 = vpop.f32.mrb[0].mxu0
        %v1567 = vadd.f32 0.0, %v1566
        %v1568 = vpop.f32.mrb[0].mxu0
        %1569 = vmatprep.mubr.bf16.mxu0 %v1450
        %1570 = vmatmul.mubr.bf16.gmra.mrb[0].mxu0 %v1237
        %v1571 = vpop.f32.mrb[0].mxu0
        %v1572 = vadd.f32 0.0, %v1571
        %v1573 = vpop.f32.mrb[0].mxu0
        %v1574 = vpop.f32.mrb[0].mxu0
        %v1575 = vadd.f32 0.0, %v1574
        %v1576 = vpop.f32.mrb[0].mxu0
        %1577 = vmatprep.mubr.bf16.mxu0 %v1453
        %1578 = vmatmul.mubr.bf16.gmra.mrb[0].mxu0 %v1243
        %v1579 = vpop.f32.mrb[0].mxu0
        %v1580 = vadd.f32 0.0, %v1579
        %v1581 = vpop.f32.mrb[0].mxu0
        %v1582 = vpop.f32.mrb[0].mxu0
        %v1583 = vadd.f32 0.0, %v1582
        %v1584 = vpop.f32.mrb[0].mxu0
        %1585 = vmatprep.mubr.bf16.mxu0 %v1456
        %1586 = vmatmul.mubr.bf16.gmra.mrb[0].mxu0 %v1249
        %v1587 = vpop.f32.mrb[0].mxu0
        %v1588 = vadd.f32 0.0, %v1587
        %v1589 = vpop.f32.mrb[0].mxu0
        %v1590 = vpop.f32.mrb[0].mxu0
        %v1591 = vadd.f32 0.0, %v1590
        %v1592 = vpop.f32.mrb[0].mxu0
        %1593 = vmatprep.mubr.bf16.mxu0 %v1459
        %1594 = vmatmul.mubr.bf16.gmra.mrb[0].mxu0 %v1255
        %v1595 = vpop.f32.mrb[0].mxu0
        %v1596 = vadd.f32 0.0, %v1595
        %v1597 = vpop.f32.mrb[0].mxu0
        %v1598 = vpop.f32.mrb[0].mxu0
        %v1599 = vpop.f32.mrb[0].mxu0
        %1600 = vdwg.mxu0
        %v1601 = vrcp.pop %v1312
        %v1602 = vrcp.pop %v1316
        %v1603 = vrcp.pop %v1320
        %v1604 = vrcp.pop %v1324
        %v1605 = vrcp.pop %v1328
        %v1606 = vrcp.pop %v1332
        %v1607 = vrcp.pop %v1336
        %v1608 = vrcp.pop %v1340
        %v1609 = vrcp.pop %v1344
        %v1610 = vrcp.pop %v1348
        %v1611 = vrcp.pop %v1352
        %v1612 = vrcp.pop %v1356
        %v1613 = vrcp.pop %v1360
        %v1614 = vrcp.pop %v1364
        %v1615 = vrcp.pop %v1368
        %v1616 = vrcp.pop %v1372
        %v1617 = vrcp.pop %v1376
        %v1618 = vrcp.pop %v1380
        %v1619 = vrcp.pop %v1384
        %v1620 = vrcp.pop %v1388
        %v1621 = vrcp.pop %v1392
        %v1622 = vrcp.pop %v1396
        %v1623 = vrcp.pop %v1400
        %v1624 = vrcp.pop %v1404
        %v1625 = vrcp.pop %v1408
        %v1626 = vmul.f32 %v1500, %v1601
        %v1627 = vmul.f32 %v1503, %v1602
        %v1628 = vmul.f32 %v1508, %v1603
        %v1629 = vmul.f32 %v1511, %v1604
        %v1630 = vmul.f32 %v1516, %v1605
        %v1631 = vmul.f32 %v1519, %v1606
        %v1632 = vmul.f32 %v1524, %v1607
        %v1633 = vmul.f32 %v1527, %v1608
        %v1634 = vmul.f32 %v1532, %v1609
        %v1635 = vmul.f32 %v1535, %v1610
        %v1636 = vmul.f32 %v1540, %v1611
        %v1637 = vmul.f32 %v1543, %v1612
        %v1638 = vmul.f32 %v1548, %v1613
        %v1639 = vmul.f32 %v1551, %v1614
        %v1640 = vmul.f32 %v1556, %v1615
        %v1641 = vmul.f32 %v1559, %v1616
        %v1642 = vmul.f32 %v1564, %v1617
        %v1643 = vmul.f32 %v1567, %v1618
        %v1644 = vmul.f32 %v1572, %v1619
        %v1645 = vmul.f32 %v1575, %v1620
        %v1646 = vmul.f32 %v1580, %v1621
        %v1647 = vmul.f32 %v1583, %v1622
        %v1648 = vmul.f32 %v1588, %v1623
        %v1649 = vmul.f32 %v1591, %v1624
        %v1650 = vmul.f32 %v1596, %v1625
        %1651 = vst [vmem:[%s338] sm:$0xff] %v1626
        %1652 = vst [vmem:[%s338 + $0x8] sm:$0xff] %v1627
        %1653 = vst [vmem:[%s338 + $0x10] sm:$0xff] %v1628
        %1654 = vst [vmem:[%s338 + $0x18] sm:$0xff] %v1629
        %1655 = vst [vmem:[%s338 + $0x20] sm:$0xff] %v1630
        %1656 = vst [vmem:[%s338 + $0x28] sm:$0xff] %v1631
        %1657 = vst [vmem:[%s338 + $0x30] sm:$0xff] %v1632
        %1658 = vst [vmem:[%s338 + $0x38] sm:$0xff] %v1633
        %1659 = vst [vmem:[%s338 + $0x40] sm:$0xff] %v1634
        %1660 = vst [vmem:[%s338 + $0x48] sm:$0xff] %v1635
        %1661 = vst [vmem:[%s338 + $0x50] sm:$0xff] %v1636
        %1662 = vst [vmem:[%s338 + $0x58] sm:$0xff] %v1637
        %1663 = vst [vmem:[%s338 + $0x60] sm:$0xff] %v1638
        %1664 = vst [vmem:[%s338 + $0x68] sm:$0xff] %v1639
        %1665 = vst [vmem:[%s338 + $0x70] sm:$0xff] %v1640
        %1666 = vst [vmem:[%s338 + $0x78] sm:$0xff] %v1641
        %1667 = vst [vmem:[%s338 + $0x80] sm:$0xff] %v1642
        %1668 = vst [vmem:[%s338 + $0x88] sm:$0xff] %v1643
        %1669 = vst [vmem:[%s338 + $0x90] sm:$0xff] %v1644
        %1670 = vst [vmem:[%s338 + $0x98] sm:$0xff] %v1645
        %1671 = vst [vmem:[%s338 + $0xa0] sm:$0xff] %v1646
        %1672 = vst [vmem:[%s338 + $0xa8] sm:$0xff] %v1647
        %1673 = vst [vmem:[%s338 + $0xb0] sm:$0xff] %v1648
        %1674 = vst [vmem:[%s338 + $0xb8] sm:$0xff] %v1649
        %1675 = vst [vmem:[%s338 + $0xc0] sm:$0xff] %v1650
        %s1676 = sand.u32 %s171, 1
        %s1677 = scalar_lea.sflag [#allocation4], %s1676
        %s1678 = sand.u32 %s171, 1
        %s1679 = smul.addr %s1678, 200
        %s1680 = scalar_lea.vmem [#allocation10], %s1679
        // Predicated region
        $region61: #{cross_attention.1} parent=43 // pred_check
          %p1681 = pneg %p181
        $region62: #{cross_attention.1} parent=43 // pred_check_branch
          %1683 = sbr.rel (%p1681) target = $region64
        $region63: #{cross_attention.1} parent=43 // pred_region
          %s1685 = ssub.s32 3200, 3200
          %1686 = vsyncadd %s1677, %s1685
          %s1687 = smul.addr %s27, 25
          %s1688 = smul.addr %s1687, 128
          %s1689 = scalar_lea.hbm %s6, %s1688
          %s1690 = sshll.u32 %s1680, 4
          %s1691 = int_to_ptr.vmem [resolvable:$true] %s1690
          %1696 = dma.vmem_to_hbm [thread:$0]  %s1691, 3200, %s1689, %s1677, 128, 128, 8
        $region64: #{cross_attention.1} parent=43 // pred_fallthru
          _
      $region44: #{cross_attention.1} parent=5 // pred_fallthru
        _
      %p1697 = scmp.le.s32.totalorder 2, %s22
      // Predicated region
      $region65: #{cross_attention.1} parent=5 // pred_check
        %p1698 = pneg %p1697
      $region66: #{cross_attention.1} parent=5 // pred_check_branch
        %1700 = sbr.rel (%p1698) target = $region68
      $region67: #{cross_attention.1} parent=5 // pred_region
        %s1701 = ssub.s32 %s22, 2
        // Predicated region
        $region69: #{cross_attention.1} parent=67 // pred_check
          %p1702 = pneg %p187
        $region70: #{cross_attention.1} parent=67 // pred_check_branch
          %1704 = sbr.rel (%p1702) target = $region72
        $region71: #{cross_attention.1} parent=67 // pred_region
          %s1705 = sand.u32 %s172, 1
          %s1706 = scalar_lea.sflag [#allocation4], %s1705
          %s1707 = sand.u32 %s172, 1
          %s1708 = smul.addr %s1707, 200
          %s1709 = scalar_lea.vmem [#allocation10], %s1708
          %1710 = dma.done %s1706, 3200
        $region72: #{cross_attention.1} parent=67 // pred_fallthru
          _
      $region68: #{cross_attention.1} parent=5 // pred_fallthru
        _
    $region6: #{cross_attention.1} parent=1 // loop_footer
      %s26 = sadd.s32 1, %s22
    $region7: #{cross_attention.1} parent=1 // loop_footer_branch
      %21 = sbr.rel target = $region3
    $region8: #{cross_attention.1} parent=1 // loop_exit
      _
    %1711 = vsyncpa [#allocation3], 1
    %s1712 = scalar_lea.sflag [#allocation3], 1
    %1713 = vsyncpa %s1712, 1
    %1714 = vsyncpa [#allocation6], 1
    %s1715 = scalar_lea.sflag [#allocation6], 1
    %1716 = vsyncpa %s1715, 1
    %1717 = vsyncpa [#allocation9], 1
    %1718 = vsyncpa [#allocation4], 1
    %s1719 = scalar_lea.sflag [#allocation4], 1
    %1720 = vsyncpa %s1719, 1

</llo_original>
